<compile_context>
chip_gen: v6e
topology: v6e:2x2x1
jax: 0.10.0
libtpu: 0.0.40
codegen_flags: <defaults>
</compile_context>

<pallas_src>
import jax
import jax.numpy as jnp
from jax.experimental import pallas as pl
from jax.experimental.pallas import tpu as pltpu

LN_EPS = 1e-5  # torch.nn.LayerNorm default

# Row layout of the packed small-parameter slab ([8, F] per layer).
ROW_BF1, ROW_BO, ROW_G1, ROW_B1, ROW_BF2, ROW_G2, ROW_B2 = range(7)


def _layernorm(x, gamma, beta):
    mu = jnp.mean(x, axis=-1, keepdims=True)
    var = jnp.mean((x - mu) ** 2, axis=-1, keepdims=True)
    return (x - mu) * jax.lax.rsqrt(var + LN_EPS) * gamma + beta


def make_fused_kernel(num_heads, head_dim, use_prior, n_pad):
    """One kernel body invoked per layer of the grid=(num_layers,) pipeline."""
    HD = num_heads * head_dim

    def kernel(*refs):
        if use_prior:
            (x_ref, prior_ref, wqkv_ref, wo_ref, w1_ref, w2_ref, sp_ref,
             out_ref, attn_ref, ctx_ref) = refs
        else:
            (x_ref, wqkv_ref, wo_ref, w1_ref, w2_ref, sp_ref,
             out_ref, attn_ref, ctx_ref) = refs
            prior_ref = None

        l = pl.program_id(0)

        # Cross-layer carry: the out block index is constant over the layer
        # axis, so its VMEM buffer stays resident across grid steps.  This
        # REQUIRES the layer axis to remain "arbitrary" (sequential) -- do NOT
        # flip it to "parallel".
        @pl.when(l == 0)
        def _():
            out_ref[...] = x_ref[...]

        x = out_ref[...]                      # [N, D] carried activation
        N, D = x.shape

        # bf16-stored weights (halved weight DMA); upcast once for the MXU.
        wqkv = wqkv_ref[0].astype(jnp.float32)   # [D, 3*HD] (wq cols pre-scaled)
        wo = wo_ref[0].astype(jnp.float32)       # [HD, D]
        w1 = w1_ref[0].astype(jnp.float32)       # [D, F]
        w2 = w2_ref[0].astype(jnp.float32)       # [F, D]
        sp = sp_ref[0]                           # [8, F] packed 1-row params

        bf1 = sp[ROW_BF1:ROW_BF1 + 1, :]         # [1, F]
        bo = sp[ROW_BO:ROW_BO + 1, :D]           # [1, D]
        g1 = sp[ROW_G1:ROW_G1 + 1, :D]
        b1 = sp[ROW_B1:ROW_B1 + 1, :D]
        bf2 = sp[ROW_BF2:ROW_BF2 + 1, :D]
        g2 = sp[ROW_G2:ROW_G2 + 1, :D]
        b2 = sp[ROW_B2:ROW_B2 + 1, :D]

        # Fused QKV: one MXU issue instead of three.
        qkv = jnp.dot(x, wqkv, preferred_element_type=jnp.float32)  # [N, 3*HD]
        v = qkv[:, 2 * HD:3 * HD]

        lane_pad = (jnp.zeros((N, n_pad - N), jnp.float32)
                    if n_pad > N else None)

        def pad_lanes(a):
            # Lane-dense [N, n_pad] so the attn store is an unmasked vst.
            return a if lane_pad is None else jnp.concatenate([a, lane_pad], -1)

        def prior_path():
            # Layer 0 (use_prior): every head uses the prior; the q.kT scores,
            # softmax max/exp/reciprocal are skipped entirely.
            prior = prior_ref[...]                               # read once
            ctx_ref[...] = jnp.dot(prior, v,
                                   preferred_element_type=jnp.float32)
            prior_p = pad_lanes(prior)
            for h in range(num_heads):
                attn_ref[0, h] = prior_p

        def softmax_path():
            q = qkv[:, 0:HD]
            k = qkv[:, HD:2 * HD]
            # TODO(synk): switch to a batched dot_general / fori_loop over
            # heads if num_heads grows beyond ~4 (vreg-pressure).
            for h in range(num_heads):
                sl = slice(h * head_dim, (h + 1) * head_dim)
                s = jax.lax.dot_general(q[:, sl], k[:, sl],
                                        (((1,), (1,)), ((), ())),
                                        preferred_element_type=jnp.float32)
                m = jnp.max(s, axis=-1, keepdims=True)
                e = jnp.exp(s - m)
                # approx reciprocal (EUP): rows sum to 1 +/- ~1e-4 rel err.
                a = e * pl.reciprocal(jnp.sum(e, axis=-1, keepdims=True),
                                      approx=True)
                attn_ref[0, h] = pad_lanes(a)
                ctx_ref[:, sl] = jnp.dot(a, v[:, sl],
                                         preferred_element_type=jnp.float32)

        if use_prior:
            pl.when(l == 0)(prior_path)
            pl.when(l != 0)(softmax_path)
        else:
            softmax_path()

        # Single out-projection over the concatenated heads (one MXU issue).
        o = jnp.dot(ctx_ref[...], wo, preferred_element_type=jnp.float32) + bo
        h1 = _layernorm(x + o, g1, b1)          # dropout1 == identity (eval)

        # FFN: Linear -> ReLU -> (Dropout=id) -> Linear, residual, LayerNorm2
        f = jnp.dot(h1, w1, preferred_element_type=jnp.float32) + bf1
        f = jnp.maximum(f, 0.0)
        f = jnp.dot(f, w2, preferred_element_type=jnp.float32) + bf2
        out_ref[...] = _layernorm(h1 + f, g2, b2)

    return kernel


# --------------------------- host-side param prep ---------------------------

def prepare_stacked_params(layer_params, head_dim, weight_dtype=jnp.bfloat16):
    """Host-side, one-time: stack per-layer weights along a leading L axis,
    fuse wq|wk|wv into one slab with 1/sqrt(head_dim) folded into the wq
    columns, cast the big weight slabs to `weight_dtype` (bf16 halves the
    per-layer weight DMA), and pack all 1-row params into one [L, 8, F] slab.
    """
    F = layer_params[0]["w1"].shape[1]
    scaling = head_dim ** (-0.5)

    def pack_small(p):
        def pad(v):
            v = v.reshape(1, -1)
            return jnp.pad(v, ((0, 0), (0, F - v.shape[1])))
        rows = [pad(p["bf1"]), pad(p["bo"]), pad(p["g1"]), pad(p["b1"]),
                pad(p["bf2"]), pad(p["g2"]), pad(p["b2"]),
                jnp.zeros((1, F), jnp.float32)]          # spare -> 8 sublanes
        return jnp.concatenate(rows, axis=0)             # [8, F]

    def fused_qkv(p):
        return jnp.concatenate([p["wq"] * scaling, p["wk"], p["wv"]], axis=1)

    return {
        "wqkv": jnp.stack([fused_qkv(p) for p in layer_params]).astype(weight_dtype),
        "wo": jnp.stack([p["wo"] for p in layer_params]).astype(weight_dtype),
        "w1": jnp.stack([p["w1"] for p in layer_params]).astype(weight_dtype),
        "w2": jnp.stack([p["w2"] for p in layer_params]).astype(weight_dtype),
        "sp": jnp.stack([pack_small(p) for p in layer_params]),  # f32
    }


def attention_kernel_qk_forward(x, prior_guide, stacked, num_heads, head_dim,
                                use_prior=True):
    """AttentionKernelQK.forward: one fused pallas_call over all layers."""
    N, D = x.shape
    L = stacked["wqkv"].shape[0]
    HD = num_heads * head_dim
    F = stacked["w1"].shape[-1]
    H = num_heads
    NPAD = max(128, pl.cdiv(N, 128) * 128)   # lane-dense attention store width

    def per_layer(shape):
        zeros = (0,) * len(shape)
        return pl.BlockSpec((1,) + tuple(shape), lambda l: (l,) + zeros)

    inputs = [x]
    in_specs = [pl.BlockSpec((N, D), lambda l: (0, 0))]
    if use_prior:
        inputs.append(prior_guide)
        in_specs.append(pl.BlockSpec((N, N), lambda l: (0, 0)))
    inputs += [stacked["wqkv"], stacked["wo"], stacked["w1"], stacked["w2"],
               stacked["sp"]]
    in_specs += [per_layer((D, 3 * HD)), per_layer((HD, D)),
                 per_layer((D, F)), per_layer((F, D)), per_layer((8, F))]

    out_shape = (jax.ShapeDtypeStruct((N, D), jnp.float32),
                 jax.ShapeDtypeStruct((L, H, N, NPAD), jnp.float32))
    out_specs = (pl.BlockSpec((N, D), lambda l: (0, 0)),          # resident carry
                 pl.BlockSpec((1, H, N, NPAD), lambda l: (l, 0, 0, 0)))

    mm_flops = (2 * N * D * 3 * HD                 # fused qkv
                + H * 2 * N * N * head_dim * 2     # scores + attn @ v
                + 2 * N * HD * D                   # out proj
                + 2 * 2 * N * D * F)               # ffn
    cost = pl.CostEstimate(
        flops=int(L * (mm_flops + 16 * N * D)),
        transcendentals=int(max(L - (1 if use_prior else 0), 0) * H * N * N),
        bytes_accessed=int(sum(int(a.size) * a.dtype.itemsize for a in inputs)
                           + 4 * (N * D + L * H * N * NPAD)),
    )

    # Size the scoped-VMEM request from the actual resident set:
    # activations + outputs + scratch + 2x (double-buffered) per-layer slabs.
    per_layer_bytes = sum((int(stacked[k].size) // L) * stacked[k].dtype.itemsize
                          for k in ("wqkv", "wo", "w1", "w2", "sp"))
    resident_bytes = (4 * (int(x.size)
                           + (int(prior_guide.size) if use_prior else 0)
                           + N * D + 2 * H * N * NPAD + N * HD)
                      + 2 * per_layer_bytes)
    vmem_limit = int(min(64 * 2 ** 20, max(4 * resident_bytes, 16 * 2 ** 20)))

    out, attn_padded = pl.pallas_call(
        make_fused_kernel(H, head_dim, use_prior, NPAD),
        grid=(L,),
        in_specs=in_specs,
        out_specs=out_specs,
        out_shape=out_shape,
        scratch_shapes=[pltpu.VMEM((N, HD), jnp.float32)],   # head-context
        compiler_params=pltpu.CompilerParams(
            # Layer axis MUST stay "arbitrary": the output x-block is the
            # cross-layer carry (constant index); "parallel" would break it.
            dimension_semantics=("arbitrary",),
            vmem_limit_bytes=vmem_limit),
        cost_estimate=cost,
    )(*inputs)

    attn = attn_padded[:, :, :, :N]               # strip lane padding on host
    return out, [attn[i] for i in range(L)]


# ----------------------------- parameter setup -----------------------------

def init_layer_params(key, embed_dim, num_heads, head_dim):
    """Deterministic init mimicking nn.Linear default U(-1/sqrt(fan_in), ...).
    Weights stored transposed ([in, out]); LayerNorm uses gamma=1, beta=0.
    (attn_params from the PyTorch module is unused in forward and omitted.)"""
    hdim = num_heads * head_dim
    ffn_dim = 4 * embed_dim
    ks = jax.random.split(key, 9)

    def lin(k, fan_in, fan_out):
        bound = 1.0 / (fan_in ** 0.5)
        return jax.random.uniform(k, (fan_in, fan_out), jnp.float32, -bound, bound)

    def bias(k, fan_in, fan_out):
        bound = 1.0 / (fan_in ** 0.5)
        return jax.random.uniform(k, (1, fan_out), jnp.float32, -bound, bound)

    return {
        "wq": lin(ks[0], embed_dim, hdim),
        "wk": lin(ks[1], embed_dim, hdim),
        "wv": lin(ks[2], embed_dim, hdim),
        "wo": lin(ks[3], hdim, embed_dim),
        "bo": bias(ks[4], hdim, embed_dim),
        "g1": jnp.ones((1, embed_dim), jnp.float32),
        "b1": jnp.zeros((1, embed_dim), jnp.float32),
        "w1": lin(ks[5], embed_dim, ffn_dim),
        "bf1": bias(ks[6], embed_dim, ffn_dim),
        "w2": lin(ks[7], ffn_dim, embed_dim),
        "bf2": bias(ks[8], ffn_dim, embed_dim),
        "g2": jnp.ones((1, embed_dim), jnp.float32),
        "b2": jnp.zeros((1, embed_dim), jnp.float32),
    }


def round_weights(p, dtype=jnp.bfloat16):
    """Round the six big weight matrices through `dtype` (and back to f32) so
    the reference and the kernel (which stores them in bf16) use identical
    weight values; biases / LayerNorm params stay full f32."""
    q = dict(p)
    for k in ("wq", "wk", "wv", "wo", "w1", "w2"):
        q[k] = p[k].astype(dtype).astype(jnp.float32)
    return q


# ----------------------------- pure-JAX reference ---------------------------

def ref_layer(x, p, num_heads, head_dim, prior=None):
    N, D = x.shape
    scaling = head_dim ** (-0.5)
    q = (x @ p["wq"]).reshape(N, num_heads, head_dim).transpose(1, 0, 2)
    k = (x @ p["wk"]).reshape(N, num_heads, head_dim).transpose(1, 0, 2)
    v = (x @ p["wv"]).reshape(N, num_heads, head_dim).transpose(1, 0, 2)
    scores = jnp.einsum("hnd,hmd->hnm", q, k) * scaling
    if prior is not None:
        attn = jnp.broadcast_to(prior[None], (num_heads, N, N))
    else:
        attn = jax.nn.softmax(scores, axis=-1)
    out = jnp.einsum("hnm,hmd->hnd", attn, v).transpose(1, 0, 2).reshape(N, -1)
    out = out @ p["wo"] + p["bo"]
    h1 = _layernorm(x + out, p["g1"], p["b1"])
    f = jnp.maximum(h1 @ p["w1"] + p["bf1"], 0.0) @ p["w2"] + p["bf2"]
    return _layernorm(h1 + f, p["g2"], p["b2"]), attn


def ref_forward(x, prior, layer_params, num_heads, head_dim):
    attns = []
    x, a = ref_layer(x, layer_params[0], num_heads, head_dim, prior=prior)
    attns.append(a)
    for p in layer_params[1:]:
        x, a = ref_layer(x, p, num_heads, head_dim, prior=None)
        attns.append(a)
    return x, attns


# ----------------------------------- main -----------------------------------

if __name__ == "__main__":
    NUM_NODES = 8
    EMBED_DIM = 32
    NUM_HEADS = 2
    NUM_LAYERS = 3
    HEAD_DIM = EMBED_DIM // NUM_HEADS  # multihead_agg='concat'

    key = jax.random.PRNGKey(0)
    kx, kp, *klayers = jax.random.split(key, 2 + NUM_LAYERS)

    x = jax.random.normal(kx, (NUM_NODES, EMBED_DIM), jnp.float32)
    prior_logits = jax.random.normal(kp, (NUM_NODES, NUM_NODES), jnp.float32)
    prior_guide = jax.nn.softmax(prior_logits, axis=-1)  # row-stochastic [N, N]

    layer_params = [round_weights(init_layer_params(k, EMBED_DIM, NUM_HEADS,
                                                    HEAD_DIM))
                    for k in klayers]
    stacked = prepare_stacked_params(layer_params, HEAD_DIM,
                                     weight_dtype=jnp.bfloat16)  # host, once

    out, attentions = attention_kernel_qk_forward(
        x, prior_guide, stacked, NUM_HEADS, HEAD_DIM, use_prior=True)
    out = jax.block_until_ready(out)
    attentions = [jax.block_until_ready(a) for a in attentions]

    # Sanity-check against a pure-JAX reference built from the same
    # bf16-rounded weights.  Tolerance 2e-3 covers the EUP approximate
    # reciprocal in the softmax (rel err ~1e-4) and accumulation-order diffs.
    ref_out, ref_attns = ref_forward(x, prior_guide, layer_params,
                                     NUM_HEADS, HEAD_DIM)
    assert out.shape == (NUM_NODES, EMBED_DIM)
    assert all(a.shape == (NUM_HEADS, NUM_NODES, NUM_NODES) for a in attentions)
    assert jnp.allclose(out, ref_out, rtol=2e-3, atol=2e-3)
    for a, ra in zip(attentions, ref_attns):
        assert jnp.allclose(a, ra, rtol=2e-3, atol=2e-3)

    print("KERNEL_OK")
</pallas_src>

<mosaic_0001>
module attributes {stable_mosaic.version = 11 : i64} {
  func.func @kernel(%arg0: i32, %arg1: memref<8x32xf32, #tpu.memory_space<vmem>>, %arg2: memref<8x8xf32, #tpu.memory_space<vmem>>, %arg3: memref<1x32x96xbf16, #tpu.memory_space<vmem>>, %arg4: memref<1x32x32xbf16, #tpu.memory_space<vmem>>, %arg5: memref<1x32x128xbf16, #tpu.memory_space<vmem>>, %arg6: memref<1x128x32xbf16, #tpu.memory_space<vmem>>, %arg7: memref<1x8x128xf32, #tpu.memory_space<vmem>>, %arg8: memref<8x32xf32, #tpu.memory_space<vmem>>, %arg9: memref<1x2x8x128xf32, #tpu.memory_space<vmem>>, %arg10: memref<8x32xf32, #tpu.memory_space<vmem>>) attributes {dimension_semantics = [#tpu.dimension_semantics<arbitrary>], iteration_bounds = array<i64: 3>, scalar_prefetch = 0 : i64, scratch_operands = 1 : i64, tpu.core_type = #tpu.core_type<tc>, window_params = [{pipeline_mode = #tpu.pipeline_mode<synchronous>, transform_indices = @transform_0, window_bounds = array<i64: 8, 32>}, {pipeline_mode = #tpu.pipeline_mode<synchronous>, transform_indices = @transform_1, window_bounds = array<i64: 8, 8>}, {transform_indices = @transform_2, window_bounds = array<i64: 1, 32, 96>}, {transform_indices = @transform_3, window_bounds = array<i64: 1, 32, 32>}, {transform_indices = @transform_4, window_bounds = array<i64: 1, 32, 128>}, {transform_indices = @transform_5, window_bounds = array<i64: 1, 128, 32>}, {transform_indices = @transform_6, window_bounds = array<i64: 1, 8, 128>}, {pipeline_mode = #tpu.pipeline_mode<synchronous>, transform_indices = @transform_7, window_bounds = array<i64: 8, 32>}, {transform_indices = @transform_8, window_bounds = array<i64: 1, 2, 8, 128>}]} {
    %c0_i32 = arith.constant 0 : i32
    %0 = arith.cmpi eq, %arg0, %c0_i32 : i32
    %1 = arith.extui %0 : i1 to i32
    %c0_i32_0 = arith.constant 0 : i32
    %2 = arith.cmpi ne, %1, %c0_i32_0 : i32
    scf.if %2 {
      %c0_40 = arith.constant 0 : index
      %c0_41 = arith.constant 0 : index
      %93 = vector.load %arg1[%c0_40, %c0_41] : memref<8x32xf32, #tpu.memory_space<vmem>>, vector<8x32xf32>
      %c0_42 = arith.constant 0 : index
      %c0_43 = arith.constant 0 : index
      %94 = vector.load %arg8[%c0_42, %c0_43] : memref<8x32xf32, #tpu.memory_space<vmem>>, vector<8x32xf32>
      tpu.vector_store %arg8[%c0_42, %c0_43], %93 {strides = array<i32>} : memref<8x32xf32, #tpu.memory_space<vmem>>, vector<8x32xf32>,
    } else {
    }
    %c0 = arith.constant 0 : index
    %c0_1 = arith.constant 0 : index
    %3 = vector.load %arg8[%c0, %c0_1] : memref<8x32xf32, #tpu.memory_space<vmem>>, vector<8x32xf32>
    %c0_2 = arith.constant 0 : index
    %c0_3 = arith.constant 0 : index
    %c0_4 = arith.constant 0 : index
    %4 = vector.load %arg3[%c0_2, %c0_3, %c0_4] : memref<1x32x96xbf16, #tpu.memory_space<vmem>>, vector<1x32x96xbf16>
    %5 = vector.shape_cast %4 : vector<1x32x96xbf16> to vector<32x96xbf16>
    %6 = arith.extf %5 : vector<32x96xbf16> to vector<32x96xf32>
    %c0_5 = arith.constant 0 : index
    %c0_6 = arith.constant 0 : index
    %c0_7 = arith.constant 0 : index
    %7 = vector.load %arg4[%c0_5, %c0_6, %c0_7] : memref<1x32x32xbf16, #tpu.memory_space<vmem>>, vector<1x32x32xbf16>
    %8 = vector.shape_cast %7 : vector<1x32x32xbf16> to vector<32x32xbf16>
    %9 = arith.extf %8 : vector<32x32xbf16> to vector<32x32xf32>
    %c0_8 = arith.constant 0 : index
    %c0_9 = arith.constant 0 : index
    %c0_10 = arith.constant 0 : index
    %10 = vector.load %arg5[%c0_8, %c0_9, %c0_10] : memref<1x32x128xbf16, #tpu.memory_space<vmem>>, vector<1x32x128xbf16>
    %11 = vector.shape_cast %10 : vector<1x32x128xbf16> to vector<32x128xbf16>
    %12 = arith.extf %11 : vector<32x128xbf16> to vector<32x128xf32>
    %c0_11 = arith.constant 0 : index
    %c0_12 = arith.constant 0 : index
    %c0_13 = arith.constant 0 : index
    %13 = vector.load %arg6[%c0_11, %c0_12, %c0_13] : memref<1x128x32xbf16, #tpu.memory_space<vmem>>, vector<1x128x32xbf16>
    %14 = vector.shape_cast %13 : vector<1x128x32xbf16> to vector<128x32xbf16>
    %15 = arith.extf %14 : vector<128x32xbf16> to vector<128x32xf32>
    %c0_14 = arith.constant 0 : index
    %c0_15 = arith.constant 0 : index
    %c0_16 = arith.constant 0 : index
    %16 = vector.load %arg7[%c0_14, %c0_15, %c0_16] : memref<1x8x128xf32, #tpu.memory_space<vmem>>, vector<1x8x128xf32>
    %17 = vector.shape_cast %16 : vector<1x8x128xf32> to vector<8x128xf32>
    %18 = vector.extract_strided_slice %17 {offsets = [0, 0], sizes = [1, 128], strides = [1, 1]} : vector<8x128xf32> to vector<1x128xf32>
    %19 = vector.extract_strided_slice %17 {offsets = [1, 0], sizes = [1, 32], strides = [1, 1]} : vector<8x128xf32> to vector<1x32xf32>
    %20 = vector.extract_strided_slice %17 {offsets = [2, 0], sizes = [1, 32], strides = [1, 1]} : vector<8x128xf32> to vector<1x32xf32>
    %21 = vector.extract_strided_slice %17 {offsets = [3, 0], sizes = [1, 32], strides = [1, 1]} : vector<8x128xf32> to vector<1x32xf32>
    %22 = vector.extract_strided_slice %17 {offsets = [4, 0], sizes = [1, 32], strides = [1, 1]} : vector<8x128xf32> to vector<1x32xf32>
    %23 = vector.extract_strided_slice %17 {offsets = [5, 0], sizes = [1, 32], strides = [1, 1]} : vector<8x128xf32> to vector<1x32xf32>
    %24 = vector.extract_strided_slice %17 {offsets = [6, 0], sizes = [1, 32], strides = [1, 1]} : vector<8x128xf32> to vector<1x32xf32>
    %cst = arith.constant dense<0.000000e+00> : vector<8x96xf32>
    %25 = tpu.matmul %3, %6, %cst {dimension_numbers = #tpu.dot_dimension_numbers<[1], [0], [0], [1], [0, 0, 1, 1], [], []>} : vector<8x32xf32>, vector<32x96xf32>, vector<8x96xf32> -> vector<8x96xf32>
    %26 = vector.extract_strided_slice %25 {offsets = [0, 64], sizes = [8, 32], strides = [1, 1]} : vector<8x96xf32> to vector<8x32xf32>
    %cst_17 = arith.constant 0.000000e+00 : f32
    %27 = vector.broadcast %cst_17 : f32 to vector<8x120xf32>
    %c0_i32_18 = arith.constant 0 : i32
    %28 = arith.cmpi eq, %arg0, %c0_i32_18 : i32
    %29 = arith.extui %28 : i1 to i32
    %c0_i32_19 = arith.constant 0 : i32
    %30 = arith.cmpi ne, %29, %c0_i32_19 : i32
    scf.if %30 {
      %c0_40 = arith.constant 0 : index
      %c0_41 = arith.constant 0 : index
      %93 = vector.load %arg2[%c0_40, %c0_41] : memref<8x8xf32, #tpu.memory_space<vmem>>, vector<8x8xf32>
      %cst_42 = arith.constant dense<0.000000e+00> : vector<8x32xf32>
      %94 = tpu.matmul %93, %26, %cst_42 {dimension_numbers = #tpu.dot_dimension_numbers<[1], [0], [0], [1], [0, 0, 1, 1], [], []>} : vector<8x8xf32>, vector<8x32xf32>, vector<8x32xf32> -> vector<8x32xf32>
      %c0_43 = arith.constant 0 : index
      %c0_44 = arith.constant 0 : index
      %95 = vector.load %arg10[%c0_43, %c0_44] : memref<8x32xf32, #tpu.memory_space<vmem>>, vector<8x32xf32>
      tpu.vector_store %arg10[%c0_43, %c0_44], %94 {strides = array<i32>} : memref<8x32xf32, #tpu.memory_space<vmem>>, vector<8x32xf32>,
      %96 = tpu.concatenate %93, %27 in 1 : vector<8x8xf32>, vector<8x120xf32> -> vector<8x128xf32>
      %c0_45 = arith.constant 0 : index
      %c0_46 = arith.constant 0 : index
      %c0_47 = arith.constant 0 : index
      %c0_48 = arith.constant 0 : index
      %97 = vector.load %arg9[%c0_45, %c0_46, %c0_47, %c0_48] : memref<1x2x8x128xf32, #tpu.memory_space<vmem>>, vector<1x1x8x128xf32>
      %98 = vector.shape_cast %97 : vector<1x1x8x128xf32> to vector<8x128xf32>
      %99 = vector.shape_cast %96 : vector<8x128xf32> to vector<1x1x8x128xf32>
      tpu.vector_store %arg9[%c0_45, %c0_46, %c0_47, %c0_48], %99 {strides = array<i32>} : memref<1x2x8x128xf32, #tpu.memory_space<vmem>>, vector<1x1x8x128xf32>,
      %c0_49 = arith.constant 0 : index
      %c1 = arith.constant 1 : index
      %c0_50 = arith.constant 0 : index
      %c0_51 = arith.constant 0 : index
      %100 = vector.load %arg9[%c0_49, %c1, %c0_50, %c0_51] : memref<1x2x8x128xf32, #tpu.memory_space<vmem>>, vector<1x1x8x128xf32>
      %101 = vector.shape_cast %100 : vector<1x1x8x128xf32> to vector<8x128xf32>
      %102 = vector.shape_cast %96 : vector<8x128xf32> to vector<1x1x8x128xf32>
      tpu.vector_store %arg9[%c0_49, %c1, %c0_50, %c0_51], %102 {strides = array<i32>} : memref<1x2x8x128xf32, #tpu.memory_space<vmem>>, vector<1x1x8x128xf32>,
    } else {
    }
    %c0_i32_20 = arith.constant 0 : i32
    %31 = arith.cmpi ne, %arg0, %c0_i32_20 : i32
    %32 = arith.extui %31 : i1 to i32
    %c0_i32_21 = arith.constant 0 : i32
    %33 = arith.cmpi ne, %32, %c0_i32_21 : i32
    scf.if %33 {
      %93 = vector.extract_strided_slice %25 {offsets = [0, 0], sizes = [8, 32], strides = [1, 1]} : vector<8x96xf32> to vector<8x32xf32>
      %94 = vector.extract_strided_slice %25 {offsets = [0, 32], sizes = [8, 32], strides = [1, 1]} : vector<8x96xf32> to vector<8x32xf32>
      %95 = vector.extract_strided_slice %93 {offsets = [0, 0], sizes = [8, 16], strides = [1, 1]} : vector<8x32xf32> to vector<8x16xf32>
      %96 = vector.extract_strided_slice %94 {offsets = [0, 0], sizes = [8, 16], strides = [1, 1]} : vector<8x32xf32> to vector<8x16xf32>
      %cst_40 = arith.constant dense<0.000000e+00> : vector<8x8xf32>
      %97 = tpu.matmul %95, %96, %cst_40 {dimension_numbers = #tpu.dot_dimension_numbers<[1], [1], [0], [0], [0, 0, 1, 0], [], []>} : vector<8x16xf32>, vector<8x16xf32>, vector<8x8xf32> -> vector<8x8xf32>
      %cst_41 = arith.constant dense<0xFF800000> : vector<8xf32>
      %98 = vector.multi_reduction <maximumf>, %97, %cst_41 [1] : vector<8x8xf32> to vector<8xf32>
      %99 = vector.shape_cast %98 : vector<8xf32> to vector<8x1xf32>
      %100 = vector.broadcast %99 : vector<8x1xf32> to vector<8x8xf32>
      %101 = arith.subf %97, %100 : vector<8x8xf32>
      %102 = math.exp %101 : vector<8x8xf32>
      %cst_42 = arith.constant dense<0.000000e+00> : vector<8xf32>
      %103 = vector.multi_reduction <add>, %102, %cst_42 [1] : vector<8x8xf32> to vector<8xf32>
      %104 = vector.shape_cast %103 : vector<8xf32> to vector<8x1xf32>
      %105 = tpu.reciprocal %104 {approx = true} : vector<8x1xf32> -> vector<8x1xf32>
      %106 = vector.broadcast %105 : vector<8x1xf32> to vector<8x8xf32>
      %107 = arith.mulf %102, %106 : vector<8x8xf32>
      %108 = tpu.concatenate %107, %27 in 1 : vector<8x8xf32>, vector<8x120xf32> -> vector<8x128xf32>
      %c0_43 = arith.constant 0 : index
      %c0_44 = arith.constant 0 : index
      %c0_45 = arith.constant 0 : index
      %c0_46 = arith.constant 0 : index
      %109 = vector.load %arg9[%c0_43, %c0_44, %c0_45, %c0_46] : memref<1x2x8x128xf32, #tpu.memory_space<vmem>>, vector<1x1x8x128xf32>
      %110 = vector.shape_cast %109 : vector<1x1x8x128xf32> to vector<8x128xf32>
      %111 = vector.shape_cast %108 : vector<8x128xf32> to vector<1x1x8x128xf32>
      tpu.vector_store %arg9[%c0_43, %c0_44, %c0_45, %c0_46], %111 {strides = array<i32>} : memref<1x2x8x128xf32, #tpu.memory_space<vmem>>, vector<1x1x8x128xf32>,
      %112 = vector.extract_strided_slice %26 {offsets = [0, 0], sizes = [8, 16], strides = [1, 1]} : vector<8x32xf32> to vector<8x16xf32>
      %cst_47 = arith.constant dense<0.000000e+00> : vector<8x16xf32>
      %113 = tpu.matmul %107, %112, %cst_47 {dimension_numbers = #tpu.dot_dimension_numbers<[1], [0], [0], [1], [0, 0, 1, 1], [], []>} : vector<8x8xf32>, vector<8x16xf32>, vector<8x16xf32> -> vector<8x16xf32>
      %c0_48 = arith.constant 0 : index
      %c0_49 = arith.constant 0 : index
      %114 = vector.load %arg10[%c0_48, %c0_49] : memref<8x32xf32, #tpu.memory_space<vmem>>, vector<8x16xf32>
      tpu.vector_store %arg10[%c0_48, %c0_49], %113 {strides = array<i32>} : memref<8x32xf32, #tpu.memory_space<vmem>>, vector<8x16xf32>,
      %115 = vector.extract_strided_slice %93 {offsets = [0, 16], sizes = [8, 16], strides = [1, 1]} : vector<8x32xf32> to vector<8x16xf32>
      %116 = vector.extract_strided_slice %94 {offsets = [0, 16], sizes = [8, 16], strides = [1, 1]} : vector<8x32xf32> to vector<8x16xf32>
      %cst_50 = arith.constant dense<0.000000e+00> : vector<8x8xf32>
      %117 = tpu.matmul %115, %116, %cst_50 {dimension_numbers = #tpu.dot_dimension_numbers<[1], [1], [0], [0], [0, 0, 1, 0], [], []>} : vector<8x16xf32>, vector<8x16xf32>, vector<8x8xf32> -> vector<8x8xf32>
      %cst_51 = arith.constant dense<0xFF800000> : vector<8xf32>
      %118 = vector.multi_reduction <maximumf>, %117, %cst_51 [1] : vector<8x8xf32> to vector<8xf32>
      %119 = vector.shape_cast %118 : vector<8xf32> to vector<8x1xf32>
      %120 = vector.broadcast %119 : vector<8x1xf32> to vector<8x8xf32>
      %121 = arith.subf %117, %120 : vector<8x8xf32>
      %122 = math.exp %121 : vector<8x8xf32>
      %cst_52 = arith.constant dense<0.000000e+00> : vector<8xf32>
      %123 = vector.multi_reduction <add>, %122, %cst_52 [1] : vector<8x8xf32> to vector<8xf32>
      %124 = vector.shape_cast %123 : vector<8xf32> to vector<8x1xf32>
      %125 = tpu.reciprocal %124 {approx = true} : vector<8x1xf32> -> vector<8x1xf32>
      %126 = vector.broadcast %125 : vector<8x1xf32> to vector<8x8xf32>
      %127 = arith.mulf %122, %126 : vector<8x8xf32>
      %128 = tpu.concatenate %127, %27 in 1 : vector<8x8xf32>, vector<8x120xf32> -> vector<8x128xf32>
      %c0_53 = arith.constant 0 : index
      %c1 = arith.constant 1 : index
      %c0_54 = arith.constant 0 : index
      %c0_55 = arith.constant 0 : index
      %129 = vector.load %arg9[%c0_53, %c1, %c0_54, %c0_55] : memref<1x2x8x128xf32, #tpu.memory_space<vmem>>, vector<1x1x8x128xf32>
      %130 = vector.shape_cast %129 : vector<1x1x8x128xf32> to vector<8x128xf32>
      %131 = vector.shape_cast %128 : vector<8x128xf32> to vector<1x1x8x128xf32>
      tpu.vector_store %arg9[%c0_53, %c1, %c0_54, %c0_55], %131 {strides = array<i32>} : memref<1x2x8x128xf32, #tpu.memory_space<vmem>>, vector<1x1x8x128xf32>,
      %132 = vector.extract_strided_slice %26 {offsets = [0, 16], sizes = [8, 16], strides = [1, 1]} : vector<8x32xf32> to vector<8x16xf32>
      %cst_56 = arith.constant dense<0.000000e+00> : vector<8x16xf32>
      %133 = tpu.matmul %127, %132, %cst_56 {dimension_numbers = #tpu.dot_dimension_numbers<[1], [0], [0], [1], [0, 0, 1, 1], [], []>} : vector<8x8xf32>, vector<8x16xf32>, vector<8x16xf32> -> vector<8x16xf32>
      %c0_57 = arith.constant 0 : index
      %c16 = arith.constant 16 : index
      %134 = vector.load %arg10[%c0_57, %c16] : memref<8x32xf32, #tpu.memory_space<vmem>>, vector<8x16xf32>
      tpu.vector_store %arg10[%c0_57, %c16], %133 {strides = array<i32>} : memref<8x32xf32, #tpu.memory_space<vmem>>, vector<8x16xf32>,
    } else {
    }
    %c0_22 = arith.constant 0 : index
    %c0_23 = arith.constant 0 : index
    %34 = vector.load %arg10[%c0_22, %c0_23] : memref<8x32xf32, #tpu.memory_space<vmem>>, vector<8x32xf32>
    %cst_24 = arith.constant dense<0.000000e+00> : vector<8x32xf32>
    %35 = tpu.matmul %34, %9, %cst_24 {dimension_numbers = #tpu.dot_dimension_numbers<[1], [0], [0], [1], [0, 0, 1, 1], [], []>} : vector<8x32xf32>, vector<32x32xf32>, vector<8x32xf32> -> vector<8x32xf32>
    %36 = vector.broadcast %19 : vector<1x32xf32> to vector<8x32xf32>
    %37 = arith.addf %35, %36 : vector<8x32xf32>
    %38 = arith.addf %3, %37 : vector<8x32xf32>
    %cst_25 = arith.constant dense<0.000000e+00> : vector<8xf32>
    %39 = vector.multi_reduction <add>, %38, %cst_25 [1] : vector<8x32xf32> to vector<8xf32>
    %40 = vector.shape_cast %39 : vector<8xf32> to vector<8x1xf32>
    %cst_26 = arith.constant 3.200000e+01 : f32
    %41 = vector.broadcast %cst_26 : f32 to vector<8x1xf32>
    %42 = arith.divf %40, %41 : vector<8x1xf32>
    %43 = vector.broadcast %42 : vector<8x1xf32> to vector<8x32xf32>
    %44 = arith.subf %38, %43 : vector<8x32xf32>
    %45 = arith.mulf %44, %44 : vector<8x32xf32>
    %cst_27 = arith.constant dense<0.000000e+00> : vector<8xf32>
    %46 = vector.multi_reduction <add>, %45, %cst_27 [1] : vector<8x32xf32> to vector<8xf32>
    %47 = vector.shape_cast %46 : vector<8xf32> to vector<8x1xf32>
    %cst_28 = arith.constant 3.200000e+01 : f32
    %48 = vector.broadcast %cst_28 : f32 to vector<8x1xf32>
    %49 = arith.divf %47, %48 : vector<8x1xf32>
    %50 = vector.broadcast %42 : vector<8x1xf32> to vector<8x32xf32>
    %51 = arith.subf %38, %50 : vector<8x32xf32>
    %cst_29 = arith.constant 9.99999974E-6 : f32
    %52 = vector.broadcast %cst_29 : f32 to vector<8x1xf32>
    %53 = arith.addf %49, %52 : vector<8x1xf32>
    %54 = math.rsqrt %53 : vector<8x1xf32>
    %55 = vector.broadcast %54 : vector<8x1xf32> to vector<8x32xf32>
    %56 = arith.mulf %51, %55 : vector<8x32xf32>
    %57 = vector.broadcast %20 : vector<1x32xf32> to vector<8x32xf32>
    %58 = arith.mulf %56, %57 : vector<8x32xf32>
    %59 = vector.broadcast %21 : vector<1x32xf32> to vector<8x32xf32>
    %60 = arith.addf %58, %59 : vector<8x32xf32>
    %cst_30 = arith.constant dense<0.000000e+00> : vector<8x128xf32>
    %61 = tpu.matmul %60, %12, %cst_30 {dimension_numbers = #tpu.dot_dimension_numbers<[1], [0], [0], [1], [0, 0, 1, 1], [], []>} : vector<8x32xf32>, vector<32x128xf32>, vector<8x128xf32> -> vector<8x128xf32>
    %62 = vector.broadcast %18 : vector<1x128xf32> to vector<8x128xf32>
    %63 = arith.addf %61, %62 : vector<8x128xf32>
    %cst_31 = arith.constant 0.000000e+00 : f32
    %64 = vector.broadcast %cst_31 : f32 to vector<8x128xf32>
    %65 = arith.maximumf %63, %64 : vector<8x128xf32>
    %cst_32 = arith.constant dense<0.000000e+00> : vector<8x32xf32>
    %66 = tpu.matmul %65, %15, %cst_32 {dimension_numbers = #tpu.dot_dimension_numbers<[1], [0], [0], [1], [0, 0, 1, 1], [], []>} : vector<8x128xf32>, vector<128x32xf32>, vector<8x32xf32> -> vector<8x32xf32>
    %67 = vector.broadcast %22 : vector<1x32xf32> to vector<8x32xf32>
    %68 = arith.addf %66, %67 : vector<8x32xf32>
    %69 = arith.addf %60, %68 : vector<8x32xf32>
    %cst_33 = arith.constant dense<0.000000e+00> : vector<8xf32>
    %70 = vector.multi_reduction <add>, %69, %cst_33 [1] : vector<8x32xf32> to vector<8xf32>
    %71 = vector.shape_cast %70 : vector<8xf32> to vector<8x1xf32>
    %cst_34 = arith.constant 3.200000e+01 : f32
    %72 = vector.broadcast %cst_34 : f32 to vector<8x1xf32>
    %73 = arith.divf %71, %72 : vector<8x1xf32>
    %74 = vector.broadcast %73 : vector<8x1xf32> to vector<8x32xf32>
    %75 = arith.subf %69, %74 : vector<8x32xf32>
    %76 = arith.mulf %75, %75 : vector<8x32xf32>
    %cst_35 = arith.constant dense<0.000000e+00> : vector<8xf32>
    %77 = vector.multi_reduction <add>, %76, %cst_35 [1] : vector<8x32xf32> to vector<8xf32>
    %78 = vector.shape_cast %77 : vector<8xf32> to vector<8x1xf32>
    %cst_36 = arith.constant 3.200000e+01 : f32
    %79 = vector.broadcast %cst_36 : f32 to vector<8x1xf32>
    %80 = arith.divf %78, %79 : vector<8x1xf32>
    %81 = vector.broadcast %73 : vector<8x1xf32> to vector<8x32xf32>
    %82 = arith.subf %69, %81 : vector<8x32xf32>
    %cst_37 = arith.constant 9.99999974E-6 : f32
    %83 = vector.broadcast %cst_37 : f32 to vector<8x1xf32>
    %84 = arith.addf %80, %83 : vector<8x1xf32>
    %85 = math.rsqrt %84 : vector<8x1xf32>
    %86 = vector.broadcast %85 : vector<8x1xf32> to vector<8x32xf32>
    %87 = arith.mulf %82, %86 : vector<8x32xf32>
    %88 = vector.broadcast %23 : vector<1x32xf32> to vector<8x32xf32>
    %89 = arith.mulf %87, %88 : vector<8x32xf32>
    %90 = vector.broadcast %24 : vector<1x32xf32> to vector<8x32xf32>
    %91 = arith.addf %89, %90 : vector<8x32xf32>
    %c0_38 = arith.constant 0 : index
    %c0_39 = arith.constant 0 : index
    %92 = vector.load %arg8[%c0_38, %c0_39] : memref<8x32xf32, #tpu.memory_space<vmem>>, vector<8x32xf32>
    tpu.vector_store %arg8[%c0_38, %c0_39], %91 {strides = array<i32>} : memref<8x32xf32, #tpu.memory_space<vmem>>, vector<8x32xf32>,
    return
  }
  func.func @transform_0(%arg0: i32) -> (i32, i32) {
    %c0_i32 = arith.constant 0 : i32
    %c0_i32_0 = arith.constant 0 : i32
    %c0_i32_1 = arith.constant 0 : i32
    return %c0_i32, %c0_i32_0 : i32, i32
  }
  func.func @transform_1(%arg0: i32) -> (i32, i32) {
    %c0_i32 = arith.constant 0 : i32
    %c0_i32_0 = arith.constant 0 : i32
    %c0_i32_1 = arith.constant 0 : i32
    return %c0_i32, %c0_i32_0 : i32, i32
  }
  func.func @transform_2(%arg0: i32) -> (i32, i32, i32) {
    %c0_i32 = arith.constant 0 : i32
    %c0_i32_0 = arith.constant 0 : i32
    %c0_i32_1 = arith.constant 0 : i32
    return %arg0, %c0_i32, %c0_i32_0 : i32, i32, i32
  }
  func.func @transform_3(%arg0: i32) -> (i32, i32, i32) {
    %c0_i32 = arith.constant 0 : i32
    %c0_i32_0 = arith.constant 0 : i32
    %c0_i32_1 = arith.constant 0 : i32
    return %arg0, %c0_i32, %c0_i32_0 : i32, i32, i32
  }
  func.func @transform_4(%arg0: i32) -> (i32, i32, i32) {
    %c0_i32 = arith.constant 0 : i32
    %c0_i32_0 = arith.constant 0 : i32
    %c0_i32_1 = arith.constant 0 : i32
    return %arg0, %c0_i32, %c0_i32_0 : i32, i32, i32
  }
  func.func @transform_5(%arg0: i32) -> (i32, i32, i32) {
    %c0_i32 = arith.constant 0 : i32
    %c0_i32_0 = arith.constant 0 : i32
    %c0_i32_1 = arith.constant 0 : i32
    return %arg0, %c0_i32, %c0_i32_0 : i32, i32, i32
  }
  func.func @transform_6(%arg0: i32) -> (i32, i32, i32) {
    %c0_i32 = arith.constant 0 : i32
    %c0_i32_0 = arith.constant 0 : i32
    %c0_i32_1 = arith.constant 0 : i32
    return %arg0, %c0_i32, %c0_i32_0 : i32, i32, i32
  }
  func.func @transform_7(%arg0: i32) -> (i32, i32) {
    %c0_i32 = arith.constant 0 : i32
    %c0_i32_0 = arith.constant 0 : i32
    %c0_i32_1 = arith.constant 0 : i32
    return %c0_i32, %c0_i32_0 : i32, i32
  }
  func.func @transform_8(%arg0: i32) -> (i32, i32, i32, i32) {
    %c0_i32 = arith.constant 0 : i32
    %c0_i32_0 = arith.constant 0 : i32
    %c0_i32_1 = arith.constant 0 : i32
    %c0_i32_2 = arith.constant 0 : i32
    return %arg0, %c0_i32, %c0_i32_0, %c0_i32_1 : i32, i32, i32, i32
  }
}

</mosaic_0001>

<llo_original>
// kernel: tpu_custom_call.1
$region0: #{tpu_custom_call.1}
  #allocation0 [shape = 'u32[]', space=smem, size = 0x4, offset = 0x4, fixed_abs, tag = 'smem constant byte address 0x4 - core index']
  #allocation1 [shape = 'u32[144,128]{1,0:T(1,128)}', space=vmem, size = 0x12000, scoped, tag = 'internal scratch']
  #allocation2 [shape = 'f32[8,32]{1,0:T(8,128)}', space=vmem, size = 0x1000, scoped, tag = 'scratch operand']
  %s0 = inlined_call_operand.vmem [shape: f32[8,32], index: 0, kind: input, shape index: {}]
  %s1 = inlined_call_operand.vmem [shape: f32[8,8], index: 1, kind: input, shape index: {}]
  %s2 = inlined_call_operand.vmem [shape: bf16[3,32,96], index: 2, kind: input, shape index: {}]
  %s3 = inlined_call_operand.vmem [shape: bf16[3,32,32], index: 3, kind: input, shape index: {}]
  %s4 = inlined_call_operand.vmem [shape: bf16[3,32,128], index: 4, kind: input, shape index: {}]
  %s5 = inlined_call_operand.vmem [shape: bf16[3,128,32], index: 5, kind: input, shape index: {}]
  %s6 = inlined_call_operand.vmem [shape: f32[3,8,128], index: 6, kind: input, shape index: {}]
  %s7 = inlined_call_operand.hbm [shape: f32[8,32], index: 7, kind: output, shape index: {0}]
  %s8 = inlined_call_operand.hbm [shape: f32[3,2,8,128], index: 8, kind: output, shape index: {1}]
  %9 = xla_tuple %s7, %s8
  %s10 = sld [smem:[#allocation0]]
  $region81: #{tpu_custom_call.1} parent=0
    _
  %s12 = ssub.s32 1, %s10
  %s13 = scalar_select 0, %s12, %s10
  $region1: #{tpu_custom_call.1} parent=0
    #allocation3 [shape = 'u8[4096]{0}', space=vmem, size = 0x1000, scoped, tag = 'output window, operand 0, single buffered']
    #allocation4 [shape = 's32[2]{0}', space=sflag, size = 0x8, scoped, tag = 'scoped memory for tpu_custom_call.1']
    #allocation5 [shape = 'u8[16384]{0}', space=vmem, size = 0x4000, scoped, tag = 'output window, operand 1']
    #allocation6 [shape = 's32[2]{0}', space=sflag, size = 0x8, scoped, tag = 'scoped memory for tpu_custom_call.1']
    %14 = vsyncpa [#allocation4], 0
    %15 = vsyncpa [#allocation6], 0
    %s16 = scalar_lea.sflag [#allocation6], 1
    %17 = vsyncpa %s16, 0
    loop: start=0, step=1, limit=5
    $region2: #{tpu_custom_call.1} parent=1 // loop_pre_header
      _
    $region3: #{tpu_custom_call.1} parent=1 // loop_header
      %s19 = sphi 0, %s23
      %p20 = scmp.ge.s32.totalorder %s19, 5
      %s27 = sphi 0, %s27
      %s29 = sphi 0, %s27
      %s30 = sphi 0, %s29
      %s44 = sphi 0, %s30
      %s48 = sphi 0, %s48
      %s50 = sphi 0, %s48
      %s51 = sphi 0, %s50
      %s65 = sphi 0, %s51
      %s71 = sphi 0, %s73
      %s74 = sphi 0, %s71
      %s75 = sphi 0, %s74
      %s91 = sphi 0, %s75
      %s97 = sphi 0, %s99
      %s100 = sphi 0, %s97
      %s101 = sphi 0, %s100
      %s117 = sphi 0, %s101
      %s123 = sphi 0, %s125
      %s126 = sphi 0, %s123
      %s127 = sphi 0, %s126
      %s143 = sphi 0, %s127
      %s149 = sphi 0, %s151
      %s152 = sphi 0, %s149
      %s153 = sphi 0, %s152
      %s169 = sphi 0, %s153
      %s175 = sphi 0, %s177
      %s178 = sphi 0, %s175
      %s179 = sphi 0, %s178
      %s195 = sphi 0, %s179
      %s199 = sphi 0, %s199
      %s201 = sphi 0, %s199
      %s202 = sphi 0, %s201
      %s216 = sphi 0, %s202
      %s222 = sphi 0, %s224
      %s225 = sphi 0, %s222
      %s226 = sphi 0, %s225
      %s242 = sphi 0, %s226
    $region4: #{tpu_custom_call.1} parent=1 // loop_header_branch
      %22 = sbr.rel (%p20) target = $region8
    $region5: #{tpu_custom_call.1} parent=1 // loop_body
      %s24 = ssub.s32 %s19, 1
      %s25 = ssub.s32 %s19, 2
      %s26 = sadd.s32 %s19, 1
      %s28 = sadd.s32 %s27, 1
      %p31 = scmp.eq.s32.totalorder %s19, 2
      %p32 = scmp.ne.s32.totalorder %s27, %s29
      %p33 = scmp.eq.s32.totalorder %s19, 0
      %p34 = por %p32, %p33
      %p35 = scmp.ne.s32.totalorder %s27, %s29
      %p36 = scmp.eq.s32.totalorder %s24, 2
      %p37 = por %p35, %p36
      %p38 = scmp.ne.s32.totalorder %s29, %s30
      %p39 = scmp.eq.s32.totalorder %s24, 0
      %p40 = por %p38, %p39
      %p41 = scmp.ne.s32.totalorder %s29, %s30
      %p42 = scmp.eq.s32.totalorder %s25, 2
      %p43 = por %p41, %p42
      %p45 = scmp.ne.s32.totalorder %s30, %s44
      %p46 = scmp.eq.s32.totalorder %s25, 0
      %p47 = por %p45, %p46
      %s49 = sadd.s32 %s48, 1
      %p52 = scmp.eq.s32.totalorder %s19, 2
      %p53 = scmp.ne.s32.totalorder %s48, %s50
      %p54 = scmp.eq.s32.totalorder %s19, 0
      %p55 = por %p53, %p54
      %p56 = scmp.ne.s32.totalorder %s48, %s50
      %p57 = scmp.eq.s32.totalorder %s24, 2
      %p58 = por %p56, %p57
      %p59 = scmp.ne.s32.totalorder %s50, %s51
      %p60 = scmp.eq.s32.totalorder %s24, 0
      %p61 = por %p59, %p60
      %p62 = scmp.ne.s32.totalorder %s50, %s51
      %p63 = scmp.eq.s32.totalorder %s25, 2
      %p64 = por %p62, %p63
      %p66 = scmp.ne.s32.totalorder %s51, %s65
      %p67 = scmp.eq.s32.totalorder %s25, 0
      %p68 = por %p66, %p67
      %s69 = ssub.s32 %s19, %s26
      %p70 = scmp.eq.s32.totalorder %s69, 0
      %s72 = sadd.s32 %s71, 1
      %s73 = scalar_select %p70, %s71, %s72
      %p76 = pneg %p70
      %p77 = scmp.eq.s32.totalorder %s19, 2
      %p78 = por %p76, %p77
      %p79 = scmp.ne.s32.totalorder %s71, %s74
      %p80 = scmp.eq.s32.totalorder %s19, 0
      %p81 = por %p79, %p80
      %p82 = scmp.ne.s32.totalorder %s71, %s74
      %p83 = scmp.eq.s32.totalorder %s24, 2
      %p84 = por %p82, %p83
      %p85 = scmp.ne.s32.totalorder %s74, %s75
      %p86 = scmp.eq.s32.totalorder %s24, 0
      %p87 = por %p85, %p86
      %p88 = scmp.ne.s32.totalorder %s74, %s75
      %p89 = scmp.eq.s32.totalorder %s25, 2
      %p90 = por %p88, %p89
      %p92 = scmp.ne.s32.totalorder %s75, %s91
      %p93 = scmp.eq.s32.totalorder %s25, 0
      %p94 = por %p92, %p93
      %s95 = ssub.s32 %s19, %s26
      %p96 = scmp.eq.s32.totalorder %s95, 0
      %s98 = sadd.s32 %s97, 1
      %s99 = scalar_select %p96, %s97, %s98
      %p102 = pneg %p96
      %p103 = scmp.eq.s32.totalorder %s19, 2
      %p104 = por %p102, %p103
      %p105 = scmp.ne.s32.totalorder %s97, %s100
      %p106 = scmp.eq.s32.totalorder %s19, 0
      %p107 = por %p105, %p106
      %p108 = scmp.ne.s32.totalorder %s97, %s100
      %p109 = scmp.eq.s32.totalorder %s24, 2
      %p110 = por %p108, %p109
      %p111 = scmp.ne.s32.totalorder %s100, %s101
      %p112 = scmp.eq.s32.totalorder %s24, 0
      %p113 = por %p111, %p112
      %p114 = scmp.ne.s32.totalorder %s100, %s101
      %p115 = scmp.eq.s32.totalorder %s25, 2
      %p116 = por %p114, %p115
      %p118 = scmp.ne.s32.totalorder %s101, %s117
      %p119 = scmp.eq.s32.totalorder %s25, 0
      %p120 = por %p118, %p119
      %s121 = ssub.s32 %s19, %s26
      %p122 = scmp.eq.s32.totalorder %s121, 0
      %s124 = sadd.s32 %s123, 1
      %s125 = scalar_select %p122, %s123, %s124
      %p128 = pneg %p122
      %p129 = scmp.eq.s32.totalorder %s19, 2
      %p130 = por %p128, %p129
      %p131 = scmp.ne.s32.totalorder %s123, %s126
      %p132 = scmp.eq.s32.totalorder %s19, 0
      %p133 = por %p131, %p132
      %p134 = scmp.ne.s32.totalorder %s123, %s126
      %p135 = scmp.eq.s32.totalorder %s24, 2
      %p136 = por %p134, %p135
      %p137 = scmp.ne.s32.totalorder %s126, %s127
      %p138 = scmp.eq.s32.totalorder %s24, 0
      %p139 = por %p137, %p138
      %p140 = scmp.ne.s32.totalorder %s126, %s127
      %p141 = scmp.eq.s32.totalorder %s25, 2
      %p142 = por %p140, %p141
      %p144 = scmp.ne.s32.totalorder %s127, %s143
      %p145 = scmp.eq.s32.totalorder %s25, 0
      %p146 = por %p144, %p145
      %s147 = ssub.s32 %s19, %s26
      %p148 = scmp.eq.s32.totalorder %s147, 0
      %s150 = sadd.s32 %s149, 1
      %s151 = scalar_select %p148, %s149, %s150
      %p154 = pneg %p148
      %p155 = scmp.eq.s32.totalorder %s19, 2
      %p156 = por %p154, %p155
      %p157 = scmp.ne.s32.totalorder %s149, %s152
      %p158 = scmp.eq.s32.totalorder %s19, 0
      %p159 = por %p157, %p158
      %p160 = scmp.ne.s32.totalorder %s149, %s152
      %p161 = scmp.eq.s32.totalorder %s24, 2
      %p162 = por %p160, %p161
      %p163 = scmp.ne.s32.totalorder %s152, %s153
      %p164 = scmp.eq.s32.totalorder %s24, 0
      %p165 = por %p163, %p164
      %p166 = scmp.ne.s32.totalorder %s152, %s153
      %p167 = scmp.eq.s32.totalorder %s25, 2
      %p168 = por %p166, %p167
      %p170 = scmp.ne.s32.totalorder %s153, %s169
      %p171 = scmp.eq.s32.totalorder %s25, 0
      %p172 = por %p170, %p171
      %s173 = ssub.s32 %s19, %s26
      %p174 = scmp.eq.s32.totalorder %s173, 0
      %s176 = sadd.s32 %s175, 1
      %s177 = scalar_select %p174, %s175, %s176
      %p180 = pneg %p174
      %p181 = scmp.eq.s32.totalorder %s19, 2
      %p182 = por %p180, %p181
      %p183 = scmp.ne.s32.totalorder %s175, %s178
      %p184 = scmp.eq.s32.totalorder %s19, 0
      %p185 = por %p183, %p184
      %p186 = scmp.ne.s32.totalorder %s175, %s178
      %p187 = scmp.eq.s32.totalorder %s24, 2
      %p188 = por %p186, %p187
      %p189 = scmp.ne.s32.totalorder %s178, %s179
      %p190 = scmp.eq.s32.totalorder %s24, 0
      %p191 = por %p189, %p190
      %p192 = scmp.ne.s32.totalorder %s178, %s179
      %p193 = scmp.eq.s32.totalorder %s25, 2
      %p194 = por %p192, %p193
      %p196 = scmp.ne.s32.totalorder %s179, %s195
      %p197 = scmp.eq.s32.totalorder %s25, 0
      %p198 = por %p196, %p197
      %s200 = sadd.s32 %s199, 1
      %p203 = scmp.eq.s32.totalorder %s19, 2
      %p204 = scmp.ne.s32.totalorder %s199, %s201
      %p205 = scmp.eq.s32.totalorder %s19, 0
      %p206 = por %p204, %p205
      %p207 = scmp.ne.s32.totalorder %s199, %s201
      %p208 = scmp.eq.s32.totalorder %s24, 2
      %p209 = por %p207, %p208
      %p210 = scmp.ne.s32.totalorder %s201, %s202
      %p211 = scmp.eq.s32.totalorder %s24, 0
      %p212 = por %p210, %p211
      %p213 = scmp.ne.s32.totalorder %s201, %s202
      %p214 = scmp.eq.s32.totalorder %s25, 2
      %p215 = por %p213, %p214
      %p217 = scmp.ne.s32.totalorder %s202, %s216
      %p218 = scmp.eq.s32.totalorder %s25, 0
      %p219 = por %p217, %p218
      %s220 = ssub.s32 %s19, %s26
      %p221 = scmp.eq.s32.totalorder %s220, 0
      %s223 = sadd.s32 %s222, 1
      %s224 = scalar_select %p221, %s222, %s223
      %p227 = pneg %p221
      %p228 = scmp.eq.s32.totalorder %s19, 2
      %p229 = por %p227, %p228
      %p230 = scmp.ne.s32.totalorder %s222, %s225
      %p231 = scmp.eq.s32.totalorder %s19, 0
      %p232 = por %p230, %p231
      %p233 = scmp.ne.s32.totalorder %s222, %s225
      %p234 = scmp.eq.s32.totalorder %s24, 2
      %p235 = por %p233, %p234
      %p236 = scmp.ne.s32.totalorder %s225, %s226
      %p237 = scmp.eq.s32.totalorder %s24, 0
      %p238 = por %p236, %p237
      %p239 = scmp.ne.s32.totalorder %s225, %s226
      %p240 = scmp.eq.s32.totalorder %s25, 2
      %p241 = por %p239, %p240
      %p243 = scmp.ne.s32.totalorder %s226, %s242
      %p244 = scmp.eq.s32.totalorder %s25, 0
      %p245 = por %p243, %p244
      %p246 = scmp.le.s32.totalorder 1, %s19
      %p247 = scmp.lt.s32.totalorder %s19, 4
      %p248 = pnand %p246, %p247
      %p249 = pneg %p248
      // Predicated region
      $region9: #{tpu_custom_call.1} parent=5 // pred_check
        _
      $region10: #{tpu_custom_call.1} parent=5 // pred_check_branch
        %251 = sbr.rel (%p248) target = $region12
      $region11: #{tpu_custom_call.1} parent=5 // pred_region
        %s252 = ssub.s32 %s19, 1
        // Predicated region
        $region13: #{tpu_custom_call.1} parent=11 // pred_check
          %p253 = pneg %p40
        $region14: #{tpu_custom_call.1} parent=11 // pred_check_branch
          %255 = sbr.rel (%p253) target = $region16
        $region15: #{tpu_custom_call.1} parent=11 // pred_region
          _
        $region16: #{tpu_custom_call.1} parent=11 // pred_fallthru
          _
        // Predicated region
        $region17: #{tpu_custom_call.1} parent=11 // pred_check
          %p256 = pneg %p61
        $region18: #{tpu_custom_call.1} parent=11 // pred_check_branch
          %258 = sbr.rel (%p256) target = $region20
        $region19: #{tpu_custom_call.1} parent=11 // pred_region
          _
        $region20: #{tpu_custom_call.1} parent=11 // pred_fallthru
          _
      $region12: #{tpu_custom_call.1} parent=5 // pred_fallthru
        _
      %p259 = scmp.lt.s32.totalorder %s19, 3
      // Predicated region
      $region21: #{tpu_custom_call.1} parent=5 // pred_check
        %p260 = pneg %p259
      $region22: #{tpu_custom_call.1} parent=5 // pred_check_branch
        %262 = sbr.rel (%p260) target = $region24
      $region23: #{tpu_custom_call.1} parent=5 // pred_region
        // Predicated region
        $region25: #{tpu_custom_call.1} parent=23 // pred_check
          %p263 = pneg %p81
        $region26: #{tpu_custom_call.1} parent=23 // pred_check_branch
          %265 = sbr.rel (%p263) target = $region28
        $region27: #{tpu_custom_call.1} parent=23 // pred_region
          %p266 = scmp.lt.s32.totalorder %s19, 2
          %s267 = scalar_select %p266, %s19, 2
          %s268 = smul.addr %s267, 4
          %s269 = smul.addr %s268, 4
          %s270 = scalar_lea.vmem %s2, %s269
        $region28: #{tpu_custom_call.1} parent=23 // pred_fallthru
          _
        // Predicated region
        $region29: #{tpu_custom_call.1} parent=23 // pred_check
          %p271 = pneg %p107
        $region30: #{tpu_custom_call.1} parent=23 // pred_check_branch
          %273 = sbr.rel (%p271) target = $region32
        $region31: #{tpu_custom_call.1} parent=23 // pred_region
          %p274 = scmp.lt.s32.totalorder %s19, 2
          %s275 = scalar_select %p274, %s19, 2
          %s276 = smul.addr %s275, 4
          %s277 = smul.addr %s276, 4
          %s278 = scalar_lea.vmem %s3, %s277
        $region32: #{tpu_custom_call.1} parent=23 // pred_fallthru
          _
        // Predicated region
        $region33: #{tpu_custom_call.1} parent=23 // pred_check
          %p279 = pneg %p133
        $region34: #{tpu_custom_call.1} parent=23 // pred_check_branch
          %281 = sbr.rel (%p279) target = $region36
        $region35: #{tpu_custom_call.1} parent=23 // pred_region
          %p282 = scmp.lt.s32.totalorder %s19, 2
          %s283 = scalar_select %p282, %s19, 2
          %s284 = smul.addr %s283, 4
          %s285 = smul.addr %s284, 4
          %s286 = scalar_lea.vmem %s4, %s285
        $region36: #{tpu_custom_call.1} parent=23 // pred_fallthru
          _
        // Predicated region
        $region37: #{tpu_custom_call.1} parent=23 // pred_check
          %p287 = pneg %p159
        $region38: #{tpu_custom_call.1} parent=23 // pred_check_branch
          %289 = sbr.rel (%p287) target = $region40
        $region39: #{tpu_custom_call.1} parent=23 // pred_region
          %p290 = scmp.lt.s32.totalorder %s19, 2
          %s291 = scalar_select %p290, %s19, 2
          %s292 = smul.addr %s291, 16
          %s293 = smul.addr %s292, 4
          %s294 = scalar_lea.vmem %s5, %s293
        $region40: #{tpu_custom_call.1} parent=23 // pred_fallthru
          _
        // Predicated region
        $region41: #{tpu_custom_call.1} parent=23 // pred_check
          %p295 = pneg %p185
        $region42: #{tpu_custom_call.1} parent=23 // pred_check_branch
          %297 = sbr.rel (%p295) target = $region44
        $region43: #{tpu_custom_call.1} parent=23 // pred_region
          %p298 = scmp.lt.s32.totalorder %s19, 2
          %s299 = scalar_select %p298, %s19, 2
          %s300 = smul.addr %s299, 8
          %s301 = scalar_lea.vmem %s6, %s300
        $region44: #{tpu_custom_call.1} parent=23 // pred_fallthru
          _
      $region24: #{tpu_custom_call.1} parent=5 // pred_fallthru
        _
      %p302 = scmp.le.s32.totalorder 1, %s19
      %p303 = scmp.lt.s32.totalorder %s19, 4
      %p304 = pnand %p302, %p303
      %p305 = pneg %p304
      // Predicated region
      $region45: #{tpu_custom_call.1} parent=5 // pred_check
        _
      $region46: #{tpu_custom_call.1} parent=5 // pred_check_branch
        %307 = sbr.rel (%p304) target = $region48
      $region47: #{tpu_custom_call.1} parent=5 // pred_region
        %s308 = ssub.s32 %s19, 1
        %p309 = pneg %p40
        %p310 = pneg %p37
        %p311 = pneg %p61
        %p312 = pneg %p58
        %p313 = scmp.lt.s32.totalorder %s24, 2
        %s314 = scalar_select %p313, %s24, 2
        %s315 = smul.addr %s314, 4
        %s316 = smul.addr %s315, 4
        %s317 = scalar_lea.vmem %s2, %s316
        %p318 = pneg %p87
        %p319 = pneg %p84
        %p320 = scmp.lt.s32.totalorder %s24, 2
        %s321 = scalar_select %p320, %s24, 2
        %s322 = smul.addr %s321, 4
        %s323 = smul.addr %s322, 4
        %s324 = scalar_lea.vmem %s3, %s323
        %p325 = pneg %p113
        %p326 = pneg %p110
        %p327 = scmp.lt.s32.totalorder %s24, 2
        %s328 = scalar_select %p327, %s24, 2
        %s329 = smul.addr %s328, 4
        %s330 = smul.addr %s329, 4
        %s331 = scalar_lea.vmem %s4, %s330
        %p332 = pneg %p139
        %p333 = pneg %p136
        %p334 = scmp.lt.s32.totalorder %s24, 2
        %s335 = scalar_select %p334, %s24, 2
        %s336 = smul.addr %s335, 16
        %s337 = smul.addr %s336, 4
        %s338 = scalar_lea.vmem %s5, %s337
        %p339 = pneg %p165
        %p340 = pneg %p162
        %p341 = scmp.lt.s32.totalorder %s24, 2
        %s342 = scalar_select %p341, %s24, 2
        %s343 = smul.addr %s342, 8
        %s344 = scalar_lea.vmem %s6, %s343
        %p345 = pneg %p191
        %p346 = pneg %p188
        %p347 = pneg %p212
        %p348 = pneg %p209
        %p349 = pneg %p238
        %p350 = pneg %p235
        %s351 = sand.u32 %s225, 1
        %s352 = scalar_lea.sflag [#allocation6], %s351
        %s353 = sand.u32 %s225, 1
        %s354 = smul.addr %s353, 16
        %s355 = scalar_lea.vmem [#allocation5], %s354
        %p356 = scmp.lt.s32.totalorder %s24, 2
        %s357 = scalar_select %p356, %s24, 2
        %s358 = smul.addr %s357, 4
        %s359 = smul.addr %s358, 4
        %s360 = scalar_lea.vmem %s2, %s359
        %p361 = scmp.lt.s32.totalorder %s24, 2
        %s362 = scalar_select %p361, %s24, 2
        %s363 = smul.addr %s362, 4
        %s364 = smul.addr %s363, 4
        %s365 = scalar_lea.vmem %s3, %s364
        %p366 = scmp.lt.s32.totalorder %s24, 2
        %s367 = scalar_select %p366, %s24, 2
        %s368 = smul.addr %s367, 4
        %s369 = smul.addr %s368, 4
        %s370 = scalar_lea.vmem %s4, %s369
        %p371 = scmp.lt.s32.totalorder %s24, 2
        %s372 = scalar_select %p371, %s24, 2
        %s373 = smul.addr %s372, 16
        %s374 = smul.addr %s373, 4
        %s375 = scalar_lea.vmem %s5, %s374
        %p376 = scmp.lt.s32.totalorder %s24, 2
        %s377 = scalar_select %p376, %s24, 2
        %s378 = smul.addr %s377, 8
        %s379 = scalar_lea.vmem %s6, %s378
        %p380 = scmp.eq.s32.totalorder %s24, 0
        // Predicated region
        $region49: #{tpu_custom_call.1} parent=47 // pred_check
          %p381 = pneg %p380
        $region50: #{tpu_custom_call.1} parent=47 // pred_check_branch
          %383 = sbr.rel (%p381) target = $region52
        $region51: #{tpu_custom_call.1} parent=47 // pred_region
          %v384 = vld [vmem:[%s0] sm:$0xff]
          %vm385 = vcmask 261120
          %386 = vst.msk [vmem:[#allocation3] sm:$0xff] %vm385, %v384
        $region52: #{tpu_custom_call.1} parent=47 // pred_fallthru
          _
        %v387 = vld [vmem:[#allocation3] sm:$0xff]
        %v388 = vld [vmem:[%s360] sm:$0xf]
        %v389 = vld [vmem:[%s360 + $0x4] sm:$0xf]
        %v390 = vld [vmem:[%s360 + $0x8] sm:$0xf]
        %v391 = vld [vmem:[%s360 + $0xc] sm:$0xf]
        %v392 = vunpack.c.l.bf16 %v388
        %v393 = vunpack.c.l.bf16 %v389
        %v394 = vunpack.c.l.bf16 %v390
        %v395 = vunpack.c.l.bf16 %v391
        %v396 = vld [vmem:[%s365] sm:$0xf]
        %v397 = vld [vmem:[%s365 + $0x4] sm:$0xf]
        %v398 = vld [vmem:[%s365 + $0x8] sm:$0xf]
        %v399 = vld [vmem:[%s365 + $0xc] sm:$0xf]
        %v400 = vunpack.c.l.bf16 %v396
        %v401 = vunpack.c.l.bf16 %v397
        %v402 = vunpack.c.l.bf16 %v398
        %v403 = vunpack.c.l.bf16 %v399
        %v404 = vld [vmem:[%s370] sm:$0xf]
        %v405 = vld [vmem:[%s370 + $0x4] sm:$0xf]
        %v406 = vld [vmem:[%s370 + $0x8] sm:$0xf]
        %v407 = vld [vmem:[%s370 + $0xc] sm:$0xf]
        %v408 = vunpack.c.l.bf16 %v404
        %v409 = vunpack.c.l.bf16 %v405
        %v410 = vunpack.c.l.bf16 %v406
        %v411 = vunpack.c.l.bf16 %v407
        %v412 = vld [vmem:[%s375] sm:$0xf]
        %v413 = vld [vmem:[%s375 + $0x4] sm:$0xf]
        %v414 = vld [vmem:[%s375 + $0x8] sm:$0xf]
        %v415 = vld [vmem:[%s375 + $0xc] sm:$0xf]
        %v416 = vld [vmem:[%s375 + $0x10] sm:$0xf]
        %v417 = vld [vmem:[%s375 + $0x14] sm:$0xf]
        %v418 = vld [vmem:[%s375 + $0x18] sm:$0xf]
        %v419 = vld [vmem:[%s375 + $0x1c] sm:$0xf]
        %v420 = vld [vmem:[%s375 + $0x20] sm:$0xf]
        %v421 = vld [vmem:[%s375 + $0x24] sm:$0xf]
        %v422 = vld [vmem:[%s375 + $0x28] sm:$0xf]
        %v423 = vld [vmem:[%s375 + $0x2c] sm:$0xf]
        %v424 = vld [vmem:[%s375 + $0x30] sm:$0xf]
        %v425 = vld [vmem:[%s375 + $0x34] sm:$0xf]
        %v426 = vld [vmem:[%s375 + $0x38] sm:$0xf]
        %v427 = vld [vmem:[%s375 + $0x3c] sm:$0xf]
        %v428 = vunpack.c.l.bf16 %v412
        %v429 = vunpack.c.l.bf16 %v413
        %v430 = vunpack.c.l.bf16 %v414
        %v431 = vunpack.c.l.bf16 %v415
        %v432 = vunpack.c.l.bf16 %v416
        %v433 = vunpack.c.l.bf16 %v417
        %v434 = vunpack.c.l.bf16 %v418
        %v435 = vunpack.c.l.bf16 %v419
        %v436 = vunpack.c.l.bf16 %v420
        %v437 = vunpack.c.l.bf16 %v421
        %v438 = vunpack.c.l.bf16 %v422
        %v439 = vunpack.c.l.bf16 %v423
        %v440 = vunpack.c.l.bf16 %v424
        %v441 = vunpack.c.l.bf16 %v425
        %v442 = vunpack.c.l.bf16 %v426
        %v443 = vunpack.c.l.bf16 %v427
        %v444 = vld [vmem:[%s379] sm:$0xff]
        %vm445 = vcmask 261120
        %v447 = vsel %vm445, %v387, 0
        %449 = vmatprep.subr.mxu0 0.0
        %450 = vmatpush1.msra.mxu0 0.0
        %451 = vmatprep.subr.mxu0 0.0
        %452 = vmatpush1.msra.mxu0 0.0
        %453 = vmatprep.subr.mxu0 0.0
        %454 = vmatpush1.msra.mxu0 0.0
        %455 = vmatprep.subr.mxu0 0.0
        %456 = vmatpush1.msra.mxu0 0.0
        %457 = vmatprep.subr.mxu0 0.0
        %458 = vmatpush1.msra.mxu0 0.0
        %459 = vmatprep.subr.mxu0 0.0
        %460 = vmatpush1.msra.mxu0 0.0
        %461 = vmatprep.subr.mxu0 0.0
        %462 = vmatpush1.msra.mxu0 0.0
        %463 = vmatprep.subr.mxu0 0.0
        %464 = vmatpush1.msra.mxu0 0.0
        %465 = vmatprep.subr.mxu0 0.0
        %466 = vmatpush1.msra.mxu0 0.0
        %467 = vmatprep.subr.mxu0 0.0
        %468 = vmatpush1.msra.mxu0 0.0
        %469 = vmatprep.subr.mxu0 0.0
        %470 = vmatpush1.msra.mxu0 0.0
        %471 = vmatprep.subr.mxu0 0.0
        %472 = vmatpush1.msra.mxu0 0.0
        %473 = vmatprep.subr.mxu0 0.0
        %474 = vmatpush1.msra.mxu0 %v395
        %475 = vmatprep.subr.mxu0 0.0
        %476 = vmatpush1.msra.mxu0 %v394
        %477 = vmatprep.subr.mxu0 0.0
        %478 = vmatpush1.msra.mxu0 %v393
        %479 = vmatprep.subr.mxu0 0.0
        %480 = vmatpush1.msra.mxu0 %v392
        %481 = vmatprep.subr.mxu0 0.0
        %482 = vmatpush2.msra.mxu0 0.0
        %483 = vmatprep.subr.mxu0 0.0
        %484 = vmatpush2.msra.mxu0 0.0
        %485 = vmatprep.subr.mxu0 0.0
        %486 = vmatpush2.msra.mxu0 0.0
        %487 = vmatprep.subr.mxu0 0.0
        %488 = vmatpush2.msra.mxu0 0.0
        %489 = vmatprep.subr.mxu0 0.0
        %490 = vmatpush2.msra.mxu0 0.0
        %491 = vmatprep.subr.mxu0 0.0
        %492 = vmatpush2.msra.mxu0 0.0
        %493 = vmatprep.subr.mxu0 0.0
        %494 = vmatpush2.msra.mxu0 0.0
        %495 = vmatprep.subr.mxu0 0.0
        %496 = vmatpush2.msra.mxu0 0.0
        %497 = vmatprep.subr.mxu0 0.0
        %498 = vmatpush2.msra.mxu0 0.0
        %499 = vmatprep.subr.mxu0 0.0
        %500 = vmatpush2.msra.mxu0 0.0
        %501 = vmatprep.subr.mxu0 0.0
        %502 = vmatpush2.msra.mxu0 0.0
        %503 = vmatprep.subr.mxu0 0.0
        %504 = vmatpush2.msra.mxu0 0.0
        %505 = vmatprep.subr.mxu0 0.0
        %506 = vmatpush2.msra.mxu0 0.0
        %507 = vmatprep.subr.mxu0 0.0
        %508 = vmatpush2.msra.mxu0 0.0
        %509 = vmatprep.subr.mxu0 0.0
        %510 = vmatpush2.msra.mxu0 0.0
        %511 = vmatprep.subr.mxu0 0.0
        %512 = vmatpush2.msra.mxu0 0.0
        %513 = vmatprep.mubr.f32.mxu0 0.0
        %514 = vmatmul.mubr.f32.gmra.mxu0 %v447
        %v515 = vpop.f32.mrf.mxu0
        %v516 = vadd.f32 0.0, %v515
        %v517 = vpop.f32.mrf.mxu0
        %518 = vdwg.mxu0
        // Predicated region
        $region53: #{tpu_custom_call.1} parent=47 // pred_check
          %p519 = pneg %p380
        $region54: #{tpu_custom_call.1} parent=47 // pred_check_branch
          %521 = sbr.rel (%p519) target = $region56
        $region55: #{tpu_custom_call.1} parent=47 // pred_region
          %v522 = vld [vmem:[%s1] sm:$0xff]
          %524 = vrot.lane.b32.xlu0 %v516, 64
          %v525 = vpop.permute.xlu0 %524
          %vm527 = vcmask 64512
          %v529 = vsel %vm527, %v522, 0
          %531 = vmatprep.subr.mxu0 0.0
          %532 = vmatpush1.msra.mxu0 0.0
          %533 = vmatprep.subr.mxu0 0.0
          %534 = vmatpush1.msra.mxu0 0.0
          %535 = vmatprep.subr.mxu0 0.0
          %536 = vmatpush1.msra.mxu0 0.0
          %537 = vmatprep.subr.mxu0 0.0
          %538 = vmatpush1.msra.mxu0 0.0
          %539 = vmatprep.subr.mxu0 0.0
          %540 = vmatpush1.msra.mxu0 0.0
          %541 = vmatprep.subr.mxu0 0.0
          %542 = vmatpush1.msra.mxu0 0.0
          %543 = vmatprep.subr.mxu0 0.0
          %544 = vmatpush1.msra.mxu0 0.0
          %545 = vmatprep.subr.mxu0 0.0
          %546 = vmatpush1.msra.mxu0 0.0
          %547 = vmatprep.subr.mxu0 0.0
          %548 = vmatpush1.msra.mxu0 0.0
          %549 = vmatprep.subr.mxu0 0.0
          %550 = vmatpush1.msra.mxu0 0.0
          %551 = vmatprep.subr.mxu0 0.0
          %552 = vmatpush1.msra.mxu0 0.0
          %553 = vmatprep.subr.mxu0 0.0
          %554 = vmatpush1.msra.mxu0 0.0
          %555 = vmatprep.subr.mxu0 0.0
          %556 = vmatpush1.msra.mxu0 0.0
          %557 = vmatprep.subr.mxu0 0.0
          %558 = vmatpush1.msra.mxu0 0.0
          %559 = vmatprep.subr.mxu0 0.0
          %560 = vmatpush1.msra.mxu0 0.0
          %561 = vmatprep.subr.mxu0 0.0
          %562 = vmatpush1.msra.mxu0 %v525
          %563 = vmatprep.subr.mxu0 0.0
          %564 = vmatpush2.msra.mxu0 0.0
          %565 = vmatprep.subr.mxu0 0.0
          %566 = vmatpush2.msra.mxu0 0.0
          %567 = vmatprep.subr.mxu0 0.0
          %568 = vmatpush2.msra.mxu0 0.0
          %569 = vmatprep.subr.mxu0 0.0
          %570 = vmatpush2.msra.mxu0 0.0
          %571 = vmatprep.subr.mxu0 0.0
          %572 = vmatpush2.msra.mxu0 0.0
          %573 = vmatprep.subr.mxu0 0.0
          %574 = vmatpush2.msra.mxu0 0.0
          %575 = vmatprep.subr.mxu0 0.0
          %576 = vmatpush2.msra.mxu0 0.0
          %577 = vmatprep.subr.mxu0 0.0
          %578 = vmatpush2.msra.mxu0 0.0
          %579 = vmatprep.subr.mxu0 0.0
          %580 = vmatpush2.msra.mxu0 0.0
          %581 = vmatprep.subr.mxu0 0.0
          %582 = vmatpush2.msra.mxu0 0.0
          %583 = vmatprep.subr.mxu0 0.0
          %584 = vmatpush2.msra.mxu0 0.0
          %585 = vmatprep.subr.mxu0 0.0
          %586 = vmatpush2.msra.mxu0 0.0
          %587 = vmatprep.subr.mxu0 0.0
          %588 = vmatpush2.msra.mxu0 0.0
          %589 = vmatprep.subr.mxu0 0.0
          %590 = vmatpush2.msra.mxu0 0.0
          %591 = vmatprep.subr.mxu0 0.0
          %592 = vmatpush2.msra.mxu0 0.0
          %593 = vmatprep.subr.mxu0 0.0
          %594 = vmatpush2.msra.mxu0 0.0
          %595 = vmatprep.mubr.f32.mxu0 0.0
          %596 = vmatmul.mubr.f32.gmra.mxu0 %v529
          %v597 = vpop.f32.mrf.mxu0
          %v598 = vadd.f32 0.0, %v597
          %v599 = vpop.f32.mrf.mxu0
          %600 = vdwg.mxu0
          %601 = vst.msk [vmem:[#allocation2] sm:$0xff] %vm445, %v598
          %v602 = vsel %vm527, %v522, 0.0
          %603 = vst [vmem:[%s355] sm:$0xff] %v602
          %s604 = scalar_lea.vmem %s355, 8 [#allocation5]
          %605 = vst [vmem:[%s604] sm:$0xff] %v602
        $region56: #{tpu_custom_call.1} parent=47 // pred_fallthru
          _
        %p606 = scmp.ne.s32.totalorder %s24, 0
        // Predicated region
        $region57: #{tpu_custom_call.1} parent=47 // pred_check
          %p607 = pneg %p606
        $region58: #{tpu_custom_call.1} parent=47 // pred_check_branch
          %609 = sbr.rel (%p607) target = $region60
        $region59: #{tpu_custom_call.1} parent=47 // pred_region
          %611 = vrot.lane.b32.xlu0 %v516, 96
          %v612 = vpop.permute.xlu0 %611
          %vm613 = vcmask 130048
          %v614 = vsel %vm613, %v516, 0
          %v616 = vsel %vm613, %v612, 0
          %618 = vmatprep.subr.mxu0 0.0
          %619 = vmatpush1.xpose.msra.mxu0 0.0
          %620 = vmatprep.subr.mxu0 0.0
          %621 = vmatpush1.xpose.msra.mxu0 0.0
          %622 = vmatprep.subr.mxu0 0.0
          %623 = vmatpush1.xpose.msra.mxu0 0.0
          %624 = vmatprep.subr.mxu0 0.0
          %625 = vmatpush1.xpose.msra.mxu0 0.0
          %626 = vmatprep.subr.mxu0 0.0
          %627 = vmatpush1.xpose.msra.mxu0 0.0
          %628 = vmatprep.subr.mxu0 0.0
          %629 = vmatpush1.xpose.msra.mxu0 0.0
          %630 = vmatprep.subr.mxu0 0.0
          %631 = vmatpush1.xpose.msra.mxu0 0.0
          %632 = vmatprep.subr.mxu0 0.0
          %633 = vmatpush1.xpose.msra.mxu0 0.0
          %634 = vmatprep.subr.mxu0 0.0
          %635 = vmatpush1.xpose.msra.mxu0 0.0
          %636 = vmatprep.subr.mxu0 0.0
          %637 = vmatpush1.xpose.msra.mxu0 0.0
          %638 = vmatprep.subr.mxu0 0.0
          %639 = vmatpush1.xpose.msra.mxu0 0.0
          %640 = vmatprep.subr.mxu0 0.0
          %641 = vmatpush1.xpose.msra.mxu0 0.0
          %642 = vmatprep.subr.mxu0 0.0
          %643 = vmatpush1.xpose.msra.mxu0 0.0
          %644 = vmatprep.subr.mxu0 0.0
          %645 = vmatpush1.xpose.msra.mxu0 0.0
          %646 = vmatprep.subr.mxu0 0.0
          %647 = vmatpush1.xpose.msra.mxu0 0.0
          %648 = vmatprep.subr.mxu0 0.0
          %649 = vmatpush1.xpose.msra.mxu0 %v616
          %650 = vmatprep.subr.mxu0 0.0
          %651 = vmatpush2.xpose.msra.mxu0 0.0
          %652 = vmatprep.subr.mxu0 0.0
          %653 = vmatpush2.xpose.msra.mxu0 0.0
          %654 = vmatprep.subr.mxu0 0.0
          %655 = vmatpush2.xpose.msra.mxu0 0.0
          %656 = vmatprep.subr.mxu0 0.0
          %657 = vmatpush2.xpose.msra.mxu0 0.0
          %658 = vmatprep.subr.mxu0 0.0
          %659 = vmatpush2.xpose.msra.mxu0 0.0
          %660 = vmatprep.subr.mxu0 0.0
          %661 = vmatpush2.xpose.msra.mxu0 0.0
          %662 = vmatprep.subr.mxu0 0.0
          %663 = vmatpush2.xpose.msra.mxu0 0.0
          %664 = vmatprep.subr.mxu0 0.0
          %665 = vmatpush2.xpose.msra.mxu0 0.0
          %666 = vmatprep.subr.mxu0 0.0
          %667 = vmatpush2.xpose.msra.mxu0 0.0
          %668 = vmatprep.subr.mxu0 0.0
          %669 = vmatpush2.xpose.msra.mxu0 0.0
          %670 = vmatprep.subr.mxu0 0.0
          %671 = vmatpush2.xpose.msra.mxu0 0.0
          %672 = vmatprep.subr.mxu0 0.0
          %673 = vmatpush2.xpose.msra.mxu0 0.0
          %674 = vmatprep.subr.mxu0 0.0
          %675 = vmatpush2.xpose.msra.mxu0 0.0
          %676 = vmatprep.subr.mxu0 0.0
          %677 = vmatpush2.xpose.msra.mxu0 0.0
          %678 = vmatprep.subr.mxu0 0.0
          %679 = vmatpush2.xpose.msra.mxu0 0.0
          %680 = vmatprep.subr.mxu0 0.0
          %681 = vmatpush2.xpose.msra.mxu0 0.0
          %682 = vmatprep.mubr.f32.mxu0 0.0
          %683 = vmatmul.mubr.f32.gmra.mxu0 %v614
          %v684 = vpop.f32.mrf.mxu0
          %v685 = vadd.f32 0.0, %v684
          %v686 = vpop.f32.mrf.mxu0
          %687 = vdwg.mxu0
          %vm688 = vcmask 64512
          %v689 = vsel %vm688, %v685, -inf
          %690 = vmax.xlane.f32.xlu0 %v689
          %v691 = vpop.xlane.xlu0 %690
          %v692 = vsub.f32 %v685, %v691
          %v693 = vmul.f32 %v692, 1.442695
          %v694 = vpow.pop %v693
          %v695 = vsel %vm688, %v694, 0.0
          %696 = vadd.xlane.f32.xlu0 %v695
          %v697 = vpop.xlane.xlu0 %696
          %v698 = vrcp.pop %v697
          %v699 = vmul.f32 %v694, %v698
          %v700 = vsel %vm688, %v699, 0.0
          %701 = vst [vmem:[%s355] sm:$0xff] %v700
          %702 = vrot.lane.b32.xlu0 %v516, 64
          %v703 = vpop.permute.xlu0 %702
          %v706 = vsel %vm688, %v699, 0
          %708 = vmatprep.subr.mxu0 0.0
          %709 = vmatpush1.msra.mxu0 0.0
          %710 = vmatprep.subr.mxu0 0.0
          %711 = vmatpush1.msra.mxu0 0.0
          %712 = vmatprep.subr.mxu0 0.0
          %713 = vmatpush1.msra.mxu0 0.0
          %714 = vmatprep.subr.mxu0 0.0
          %715 = vmatpush1.msra.mxu0 0.0
          %716 = vmatprep.subr.mxu0 0.0
          %717 = vmatpush1.msra.mxu0 0.0
          %718 = vmatprep.subr.mxu0 0.0
          %719 = vmatpush1.msra.mxu0 0.0
          %720 = vmatprep.subr.mxu0 0.0
          %721 = vmatpush1.msra.mxu0 0.0
          %722 = vmatprep.subr.mxu0 0.0
          %723 = vmatpush1.msra.mxu0 0.0
          %724 = vmatprep.subr.mxu0 0.0
          %725 = vmatpush1.msra.mxu0 0.0
          %726 = vmatprep.subr.mxu0 0.0
          %727 = vmatpush1.msra.mxu0 0.0
          %728 = vmatprep.subr.mxu0 0.0
          %729 = vmatpush1.msra.mxu0 0.0
          %730 = vmatprep.subr.mxu0 0.0
          %731 = vmatpush1.msra.mxu0 0.0
          %732 = vmatprep.subr.mxu0 0.0
          %733 = vmatpush1.msra.mxu0 0.0
          %734 = vmatprep.subr.mxu0 0.0
          %735 = vmatpush1.msra.mxu0 0.0
          %736 = vmatprep.subr.mxu0 0.0
          %737 = vmatpush1.msra.mxu0 0.0
          %738 = vmatprep.subr.mxu0 0.0
          %739 = vmatpush1.msra.mxu0 %v703
          %740 = vmatprep.subr.mxu0 0.0
          %741 = vmatpush2.msra.mxu0 0.0
          %742 = vmatprep.subr.mxu0 0.0
          %743 = vmatpush2.msra.mxu0 0.0
          %744 = vmatprep.subr.mxu0 0.0
          %745 = vmatpush2.msra.mxu0 0.0
          %746 = vmatprep.subr.mxu0 0.0
          %747 = vmatpush2.msra.mxu0 0.0
          %748 = vmatprep.subr.mxu0 0.0
          %749 = vmatpush2.msra.mxu0 0.0
          %750 = vmatprep.subr.mxu0 0.0
          %751 = vmatpush2.msra.mxu0 0.0
          %752 = vmatprep.subr.mxu0 0.0
          %753 = vmatpush2.msra.mxu0 0.0
          %754 = vmatprep.subr.mxu0 0.0
          %755 = vmatpush2.msra.mxu0 0.0
          %756 = vmatprep.subr.mxu0 0.0
          %757 = vmatpush2.msra.mxu0 0.0
          %758 = vmatprep.subr.mxu0 0.0
          %759 = vmatpush2.msra.mxu0 0.0
          %760 = vmatprep.subr.mxu0 0.0
          %761 = vmatpush2.msra.mxu0 0.0
          %762 = vmatprep.subr.mxu0 0.0
          %763 = vmatpush2.msra.mxu0 0.0
          %764 = vmatprep.subr.mxu0 0.0
          %765 = vmatpush2.msra.mxu0 0.0
          %766 = vmatprep.subr.mxu0 0.0
          %767 = vmatpush2.msra.mxu0 0.0
          %768 = vmatprep.subr.mxu0 0.0
          %769 = vmatpush2.msra.mxu0 0.0
          %770 = vmatprep.subr.mxu0 0.0
          %771 = vmatpush2.msra.mxu0 0.0
          %772 = vmatprep.mubr.f32.mxu0 0.0
          %773 = vmatmul.mubr.f32.gmra.mxu0 %v706
          %v774 = vpop.f32.mrf.mxu0
          %v775 = vadd.f32 0.0, %v774
          %v776 = vpop.f32.mrf.mxu0
          %777 = vdwg.mxu0
          %778 = vst.msk [vmem:[#allocation2] sm:$0xff] %vm613, %v775
          %779 = vrot.lane.b32.xlu0 %v516, 112
          %v780 = vpop.permute.xlu0 %779
          %781 = vrot.lane.b32.xlu0 %v516, 80
          %v782 = vpop.permute.xlu0 %781
          %v783 = vsel %vm613, %v780, 0
          %v785 = vsel %vm613, %v782, 0
          %787 = vmatprep.subr.mxu0 0.0
          %788 = vmatpush1.xpose.msra.mxu0 0.0
          %789 = vmatprep.subr.mxu0 0.0
          %790 = vmatpush1.xpose.msra.mxu0 0.0
          %791 = vmatprep.subr.mxu0 0.0
          %792 = vmatpush1.xpose.msra.mxu0 0.0
          %793 = vmatprep.subr.mxu0 0.0
          %794 = vmatpush1.xpose.msra.mxu0 0.0
          %795 = vmatprep.subr.mxu0 0.0
          %796 = vmatpush1.xpose.msra.mxu0 0.0
          %797 = vmatprep.subr.mxu0 0.0
          %798 = vmatpush1.xpose.msra.mxu0 0.0
          %799 = vmatprep.subr.mxu0 0.0
          %800 = vmatpush1.xpose.msra.mxu0 0.0
          %801 = vmatprep.subr.mxu0 0.0
          %802 = vmatpush1.xpose.msra.mxu0 0.0
          %803 = vmatprep.subr.mxu0 0.0
          %804 = vmatpush1.xpose.msra.mxu0 0.0
          %805 = vmatprep.subr.mxu0 0.0
          %806 = vmatpush1.xpose.msra.mxu0 0.0
          %807 = vmatprep.subr.mxu0 0.0
          %808 = vmatpush1.xpose.msra.mxu0 0.0
          %809 = vmatprep.subr.mxu0 0.0
          %810 = vmatpush1.xpose.msra.mxu0 0.0
          %811 = vmatprep.subr.mxu0 0.0
          %812 = vmatpush1.xpose.msra.mxu0 0.0
          %813 = vmatprep.subr.mxu0 0.0
          %814 = vmatpush1.xpose.msra.mxu0 0.0
          %815 = vmatprep.subr.mxu0 0.0
          %816 = vmatpush1.xpose.msra.mxu0 0.0
          %817 = vmatprep.subr.mxu0 0.0
          %818 = vmatpush1.xpose.msra.mxu0 %v785
          %819 = vmatprep.subr.mxu0 0.0
          %820 = vmatpush2.xpose.msra.mxu0 0.0
          %821 = vmatprep.subr.mxu0 0.0
          %822 = vmatpush2.xpose.msra.mxu0 0.0
          %823 = vmatprep.subr.mxu0 0.0
          %824 = vmatpush2.xpose.msra.mxu0 0.0
          %825 = vmatprep.subr.mxu0 0.0
          %826 = vmatpush2.xpose.msra.mxu0 0.0
          %827 = vmatprep.subr.mxu0 0.0
          %828 = vmatpush2.xpose.msra.mxu0 0.0
          %829 = vmatprep.subr.mxu0 0.0
          %830 = vmatpush2.xpose.msra.mxu0 0.0
          %831 = vmatprep.subr.mxu0 0.0
          %832 = vmatpush2.xpose.msra.mxu0 0.0
          %833 = vmatprep.subr.mxu0 0.0
          %834 = vmatpush2.xpose.msra.mxu0 0.0
          %835 = vmatprep.subr.mxu0 0.0
          %836 = vmatpush2.xpose.msra.mxu0 0.0
          %837 = vmatprep.subr.mxu0 0.0
          %838 = vmatpush2.xpose.msra.mxu0 0.0
          %839 = vmatprep.subr.mxu0 0.0
          %840 = vmatpush2.xpose.msra.mxu0 0.0
          %841 = vmatprep.subr.mxu0 0.0
          %842 = vmatpush2.xpose.msra.mxu0 0.0
          %843 = vmatprep.subr.mxu0 0.0
          %844 = vmatpush2.xpose.msra.mxu0 0.0
          %845 = vmatprep.subr.mxu0 0.0
          %846 = vmatpush2.xpose.msra.mxu0 0.0
          %847 = vmatprep.subr.mxu0 0.0
          %848 = vmatpush2.xpose.msra.mxu0 0.0
          %849 = vmatprep.subr.mxu0 0.0
          %850 = vmatpush2.xpose.msra.mxu0 0.0
          %851 = vmatprep.mubr.f32.mxu0 0.0
          %852 = vmatmul.mubr.f32.gmra.mxu0 %v783
          %v853 = vpop.f32.mrf.mxu0
          %v854 = vadd.f32 0.0, %v853
          %v855 = vpop.f32.mrf.mxu0
          %856 = vdwg.mxu0
          %v857 = vsel %vm688, %v854, -inf
          %858 = vmax.xlane.f32.xlu0 %v857
          %v859 = vpop.xlane.xlu0 %858
          %v860 = vsub.f32 %v854, %v859
          %v861 = vmul.f32 %v860, 1.442695
          %v862 = vpow.pop %v861
          %v863 = vsel %vm688, %v862, 0.0
          %864 = vadd.xlane.f32.xlu0 %v863
          %v865 = vpop.xlane.xlu0 %864
          %v866 = vrcp.pop %v865
          %v867 = vmul.f32 %v862, %v866
          %v868 = vsel %vm688, %v867, 0.0
          %s869 = scalar_lea.vmem %s355, 8 [#allocation5]
          %870 = vst [vmem:[%s869] sm:$0xff] %v868
          %871 = vrot.lane.b32.xlu0 %v516, 48
          %v872 = vpop.permute.xlu0 %871
          %v875 = vsel %vm688, %v867, 0
          %877 = vmatprep.subr.mxu0 0.0
          %878 = vmatpush1.msra.mxu0 0.0
          %879 = vmatprep.subr.mxu0 0.0
          %880 = vmatpush1.msra.mxu0 0.0
          %881 = vmatprep.subr.mxu0 0.0
          %882 = vmatpush1.msra.mxu0 0.0
          %883 = vmatprep.subr.mxu0 0.0
          %884 = vmatpush1.msra.mxu0 0.0
          %885 = vmatprep.subr.mxu0 0.0
          %886 = vmatpush1.msra.mxu0 0.0
          %887 = vmatprep.subr.mxu0 0.0
          %888 = vmatpush1.msra.mxu0 0.0
          %889 = vmatprep.subr.mxu0 0.0
          %890 = vmatpush1.msra.mxu0 0.0
          %891 = vmatprep.subr.mxu0 0.0
          %892 = vmatpush1.msra.mxu0 0.0
          %893 = vmatprep.subr.mxu0 0.0
          %894 = vmatpush1.msra.mxu0 0.0
          %895 = vmatprep.subr.mxu0 0.0
          %896 = vmatpush1.msra.mxu0 0.0
          %897 = vmatprep.subr.mxu0 0.0
          %898 = vmatpush1.msra.mxu0 0.0
          %899 = vmatprep.subr.mxu0 0.0
          %900 = vmatpush1.msra.mxu0 0.0
          %901 = vmatprep.subr.mxu0 0.0
          %902 = vmatpush1.msra.mxu0 0.0
          %903 = vmatprep.subr.mxu0 0.0
          %904 = vmatpush1.msra.mxu0 0.0
          %905 = vmatprep.subr.mxu0 0.0
          %906 = vmatpush1.msra.mxu0 0.0
          %907 = vmatprep.subr.mxu0 0.0
          %908 = vmatpush1.msra.mxu0 %v872
          %909 = vmatprep.subr.mxu0 0.0
          %910 = vmatpush2.msra.mxu0 0.0
          %911 = vmatprep.subr.mxu0 0.0
          %912 = vmatpush2.msra.mxu0 0.0
          %913 = vmatprep.subr.mxu0 0.0
          %914 = vmatpush2.msra.mxu0 0.0
          %915 = vmatprep.subr.mxu0 0.0
          %916 = vmatpush2.msra.mxu0 0.0
          %917 = vmatprep.subr.mxu0 0.0
          %918 = vmatpush2.msra.mxu0 0.0
          %919 = vmatprep.subr.mxu0 0.0
          %920 = vmatpush2.msra.mxu0 0.0
          %921 = vmatprep.subr.mxu0 0.0
          %922 = vmatpush2.msra.mxu0 0.0
          %923 = vmatprep.subr.mxu0 0.0
          %924 = vmatpush2.msra.mxu0 0.0
          %925 = vmatprep.subr.mxu0 0.0
          %926 = vmatpush2.msra.mxu0 0.0
          %927 = vmatprep.subr.mxu0 0.0
          %928 = vmatpush2.msra.mxu0 0.0
          %929 = vmatprep.subr.mxu0 0.0
          %930 = vmatpush2.msra.mxu0 0.0
          %931 = vmatprep.subr.mxu0 0.0
          %932 = vmatpush2.msra.mxu0 0.0
          %933 = vmatprep.subr.mxu0 0.0
          %934 = vmatpush2.msra.mxu0 0.0
          %935 = vmatprep.subr.mxu0 0.0
          %936 = vmatpush2.msra.mxu0 0.0
          %937 = vmatprep.subr.mxu0 0.0
          %938 = vmatpush2.msra.mxu0 0.0
          %939 = vmatprep.subr.mxu0 0.0
          %940 = vmatpush2.msra.mxu0 0.0
          %941 = vmatprep.mubr.f32.mxu0 0.0
          %942 = vmatmul.mubr.f32.gmra.mxu0 %v875
          %v943 = vpop.f32.mrf.mxu0
          %v944 = vadd.f32 0.0, %v943
          %v945 = vpop.f32.mrf.mxu0
          %946 = vdwg.mxu0
          %948 = vrot.lane.b32.xlu0 %v944, 16
          %v949 = vpop.permute.xlu0 %948
          %vm951 = vcmask 261248
          %952 = vst.msk [vmem:[#allocation2] sm:$0xff] %vm951, %v949
        $region60: #{tpu_custom_call.1} parent=47 // pred_fallthru
          _
        %v953 = vld [vmem:[#allocation2] sm:$0xff]
        %v954 = vlaneseq
        %v955 = vshrl.u32 %v954, 7
        %v956 = vsub.s32 1, %v955
        %v957 = vrot.slane %v444, %v956
        %v959 = vsel %vm445, %v953, 0
        %961 = vmatprep.subr.mxu0 0.0
        %962 = vmatpush1.msra.mxu0 0.0
        %963 = vmatprep.subr.mxu0 0.0
        %964 = vmatpush1.msra.mxu0 0.0
        %965 = vmatprep.subr.mxu0 0.0
        %966 = vmatpush1.msra.mxu0 0.0
        %967 = vmatprep.subr.mxu0 0.0
        %968 = vmatpush1.msra.mxu0 0.0
        %969 = vmatprep.subr.mxu0 0.0
        %970 = vmatpush1.msra.mxu0 0.0
        %971 = vmatprep.subr.mxu0 0.0
        %972 = vmatpush1.msra.mxu0 0.0
        %973 = vmatprep.subr.mxu0 0.0
        %974 = vmatpush1.msra.mxu0 0.0
        %975 = vmatprep.subr.mxu0 0.0
        %976 = vmatpush1.msra.mxu0 0.0
        %977 = vmatprep.subr.mxu0 0.0
        %978 = vmatpush1.msra.mxu0 0.0
        %979 = vmatprep.subr.mxu0 0.0
        %980 = vmatpush1.msra.mxu0 0.0
        %981 = vmatprep.subr.mxu0 0.0
        %982 = vmatpush1.msra.mxu0 0.0
        %983 = vmatprep.subr.mxu0 0.0
        %984 = vmatpush1.msra.mxu0 0.0
        %985 = vmatprep.subr.mxu0 0.0
        %986 = vmatpush1.msra.mxu0 %v403
        %987 = vmatprep.subr.mxu0 0.0
        %988 = vmatpush1.msra.mxu0 %v402
        %989 = vmatprep.subr.mxu0 0.0
        %990 = vmatpush1.msra.mxu0 %v401
        %991 = vmatprep.subr.mxu0 0.0
        %992 = vmatpush1.msra.mxu0 %v400
        %993 = vmatprep.subr.mxu0 0.0
        %994 = vmatpush2.msra.mxu0 0.0
        %995 = vmatprep.subr.mxu0 0.0
        %996 = vmatpush2.msra.mxu0 0.0
        %997 = vmatprep.subr.mxu0 0.0
        %998 = vmatpush2.msra.mxu0 0.0
        %999 = vmatprep.subr.mxu0 0.0
        %1000 = vmatpush2.msra.mxu0 0.0
        %1001 = vmatprep.subr.mxu0 0.0
        %1002 = vmatpush2.msra.mxu0 0.0
        %1003 = vmatprep.subr.mxu0 0.0
        %1004 = vmatpush2.msra.mxu0 0.0
        %1005 = vmatprep.subr.mxu0 0.0
        %1006 = vmatpush2.msra.mxu0 0.0
        %1007 = vmatprep.subr.mxu0 0.0
        %1008 = vmatpush2.msra.mxu0 0.0
        %1009 = vmatprep.subr.mxu0 0.0
        %1010 = vmatpush2.msra.mxu0 0.0
        %1011 = vmatprep.subr.mxu0 0.0
        %1012 = vmatpush2.msra.mxu0 0.0
        %1013 = vmatprep.subr.mxu0 0.0
        %1014 = vmatpush2.msra.mxu0 0.0
        %1015 = vmatprep.subr.mxu0 0.0
        %1016 = vmatpush2.msra.mxu0 0.0
        %1017 = vmatprep.subr.mxu0 0.0
        %1018 = vmatpush2.msra.mxu0 0.0
        %1019 = vmatprep.subr.mxu0 0.0
        %1020 = vmatpush2.msra.mxu0 0.0
        %1021 = vmatprep.subr.mxu0 0.0
        %1022 = vmatpush2.msra.mxu0 0.0
        %1023 = vmatprep.subr.mxu0 0.0
        %1024 = vmatpush2.msra.mxu0 0.0
        %1025 = vmatprep.mubr.f32.mxu0 0.0
        %1026 = vmatmul.mubr.f32.gmra.mxu0 %v959
        %v1027 = vpop.f32.mrf.mxu0
        %v1028 = vadd.f32 %v957, %v1027
        %v1029 = vpop.f32.mrf.mxu0
        %1030 = vdwg.mxu0
        %v1031 = vadd.f32 %v387, %v1028
        %v1032 = vsel %vm445, %v1031, 0.0
        %1033 = vadd.xlane.f32.xlu0 %v1032
        %v1034 = vpop.xlane.xlu0 %1033
        %v1035 = vrcp.pop 32.0
        %v1036 = vmul.f32 %v1034, %v1035
        %v1037 = vsub.f32 %v1031, %v1036
        %v1038 = vmul.f32 %v1037, %v1037
        %v1039 = vsel %vm445, %v1038, 0.0
        %1040 = vadd.xlane.f32.xlu0 %v1039
        %v1041 = vpop.xlane.xlu0 %1040
        %v1042 = vmul.f32 %v1041, %v1035
        %v1043 = vadd.f32 %v1042, 1e-05
        %v1044 = vrsqrt.pop %v1043
        %v1045 = vmul.f32 %v1037, %v1044
        %v1046 = vlaneseq
        %v1047 = vshrl.u32 %v1046, 7
        %v1048 = vsub.s32 2, %v1047
        %v1049 = vrot.slane %v444, %v1048
        %v1050 = vmul.f32 %v1045, %v1049
        %v1051 = vlaneseq
        %v1052 = vshrl.u32 %v1051, 7
        %v1053 = vsub.s32 3, %v1052
        %v1054 = vrot.slane %v444, %v1053
        %v1055 = vadd.f32 %v1050, %v1054
        %v1056 = vlaneseq
        %v1057 = vshrl.u32 %v1056, 7
        %v1058 = vsub.s32 0, %v1057
        %v1059 = vrot.slane %v444, %v1058
        %v1061 = vsel %vm445, %v1055, 0
        %1063 = vmatprep.subr.mxu0 0.0
        %1064 = vmatpush1.msra.mxu0 0.0
        %1065 = vmatprep.subr.mxu0 0.0
        %1066 = vmatpush1.msra.mxu0 0.0
        %1067 = vmatprep.subr.mxu0 0.0
        %1068 = vmatpush1.msra.mxu0 0.0
        %1069 = vmatprep.subr.mxu0 0.0
        %1070 = vmatpush1.msra.mxu0 0.0
        %1071 = vmatprep.subr.mxu0 0.0
        %1072 = vmatpush1.msra.mxu0 0.0
        %1073 = vmatprep.subr.mxu0 0.0
        %1074 = vmatpush1.msra.mxu0 0.0
        %1075 = vmatprep.subr.mxu0 0.0
        %1076 = vmatpush1.msra.mxu0 0.0
        %1077 = vmatprep.subr.mxu0 0.0
        %1078 = vmatpush1.msra.mxu0 0.0
        %1079 = vmatprep.subr.mxu0 0.0
        %1080 = vmatpush1.msra.mxu0 0.0
        %1081 = vmatprep.subr.mxu0 0.0
        %1082 = vmatpush1.msra.mxu0 0.0
        %1083 = vmatprep.subr.mxu0 0.0
        %1084 = vmatpush1.msra.mxu0 0.0
        %1085 = vmatprep.subr.mxu0 0.0
        %1086 = vmatpush1.msra.mxu0 0.0
        %1087 = vmatprep.subr.mxu0 0.0
        %1088 = vmatpush1.msra.mxu0 %v411
        %1089 = vmatprep.subr.mxu0 0.0
        %1090 = vmatpush1.msra.mxu0 %v410
        %1091 = vmatprep.subr.mxu0 0.0
        %1092 = vmatpush1.msra.mxu0 %v409
        %1093 = vmatprep.subr.mxu0 0.0
        %1094 = vmatpush1.msra.mxu0 %v408
        %1095 = vmatprep.subr.mxu0 0.0
        %1096 = vmatpush2.msra.mxu0 0.0
        %1097 = vmatprep.subr.mxu0 0.0
        %1098 = vmatpush2.msra.mxu0 0.0
        %1099 = vmatprep.subr.mxu0 0.0
        %1100 = vmatpush2.msra.mxu0 0.0
        %1101 = vmatprep.subr.mxu0 0.0
        %1102 = vmatpush2.msra.mxu0 0.0
        %1103 = vmatprep.subr.mxu0 0.0
        %1104 = vmatpush2.msra.mxu0 0.0
        %1105 = vmatprep.subr.mxu0 0.0
        %1106 = vmatpush2.msra.mxu0 0.0
        %1107 = vmatprep.subr.mxu0 0.0
        %1108 = vmatpush2.msra.mxu0 0.0
        %1109 = vmatprep.subr.mxu0 0.0
        %1110 = vmatpush2.msra.mxu0 0.0
        %1111 = vmatprep.subr.mxu0 0.0
        %1112 = vmatpush2.msra.mxu0 0.0
        %1113 = vmatprep.subr.mxu0 0.0
        %1114 = vmatpush2.msra.mxu0 0.0
        %1115 = vmatprep.subr.mxu0 0.0
        %1116 = vmatpush2.msra.mxu0 0.0
        %1117 = vmatprep.subr.mxu0 0.0
        %1118 = vmatpush2.msra.mxu0 0.0
        %1119 = vmatprep.subr.mxu0 0.0
        %1120 = vmatpush2.msra.mxu0 0.0
        %1121 = vmatprep.subr.mxu0 0.0
        %1122 = vmatpush2.msra.mxu0 0.0
        %1123 = vmatprep.subr.mxu0 0.0
        %1124 = vmatpush2.msra.mxu0 0.0
        %1125 = vmatprep.subr.mxu0 0.0
        %1126 = vmatpush2.msra.mxu0 0.0
        %1127 = vmatprep.mubr.f32.mxu0 0.0
        %1128 = vmatmul.mubr.f32.gmra.mxu0 %v1061
        %v1129 = vpop.f32.mrf.mxu0
        %v1130 = vadd.f32 %v1059, %v1129
        %v1131 = vpop.f32.mrf.mxu0
        %1132 = vdwg.mxu0
        %v1133 = vmax.f32 %v1130, 0.0
        %v1134 = vlaneseq
        %v1135 = vshrl.u32 %v1134, 7
        %v1136 = vsub.s32 4, %v1135
        %v1137 = vrot.slane %v444, %v1136
        %1138 = vmatprep.subr.mxu0 0.0
        %1139 = vmatpush1.msra.mxu0 %v443
        %1140 = vmatprep.subr.mxu0 0.0
        %1141 = vmatpush1.msra.mxu0 %v442
        %1142 = vmatprep.subr.mxu0 0.0
        %1143 = vmatpush1.msra.mxu0 %v441
        %1144 = vmatprep.subr.mxu0 0.0
        %1145 = vmatpush1.msra.mxu0 %v440
        %1146 = vmatprep.subr.mxu0 0.0
        %1147 = vmatpush1.msra.mxu0 %v439
        %1148 = vmatprep.subr.mxu0 0.0
        %1149 = vmatpush1.msra.mxu0 %v438
        %1150 = vmatprep.subr.mxu0 0.0
        %1151 = vmatpush1.msra.mxu0 %v437
        %1152 = vmatprep.subr.mxu0 0.0
        %1153 = vmatpush1.msra.mxu0 %v436
        %1154 = vmatprep.subr.mxu0 0.0
        %1155 = vmatpush1.msra.mxu0 %v435
        %1156 = vmatprep.subr.mxu0 0.0
        %1157 = vmatpush1.msra.mxu0 %v434
        %1158 = vmatprep.subr.mxu0 0.0
        %1159 = vmatpush1.msra.mxu0 %v433
        %1160 = vmatprep.subr.mxu0 0.0
        %1161 = vmatpush1.msra.mxu0 %v432
        %1162 = vmatprep.subr.mxu0 0.0
        %1163 = vmatpush1.msra.mxu0 %v431
        %1164 = vmatprep.subr.mxu0 0.0
        %1165 = vmatpush1.msra.mxu0 %v430
        %1166 = vmatprep.subr.mxu0 0.0
        %1167 = vmatpush1.msra.mxu0 %v429
        %1168 = vmatprep.subr.mxu0 0.0
        %1169 = vmatpush1.msra.mxu0 %v428
        %1170 = vmatprep.subr.mxu0 0.0
        %1171 = vmatpush2.msra.mxu0 0.0
        %1172 = vmatprep.subr.mxu0 0.0
        %1173 = vmatpush2.msra.mxu0 0.0
        %1174 = vmatprep.subr.mxu0 0.0
        %1175 = vmatpush2.msra.mxu0 0.0
        %1176 = vmatprep.subr.mxu0 0.0
        %1177 = vmatpush2.msra.mxu0 0.0
        %1178 = vmatprep.subr.mxu0 0.0
        %1179 = vmatpush2.msra.mxu0 0.0
        %1180 = vmatprep.subr.mxu0 0.0
        %1181 = vmatpush2.msra.mxu0 0.0
        %1182 = vmatprep.subr.mxu0 0.0
        %1183 = vmatpush2.msra.mxu0 0.0
        %1184 = vmatprep.subr.mxu0 0.0
        %1185 = vmatpush2.msra.mxu0 0.0
        %1186 = vmatprep.subr.mxu0 0.0
        %1187 = vmatpush2.msra.mxu0 0.0
        %1188 = vmatprep.subr.mxu0 0.0
        %1189 = vmatpush2.msra.mxu0 0.0
        %1190 = vmatprep.subr.mxu0 0.0
        %1191 = vmatpush2.msra.mxu0 0.0
        %1192 = vmatprep.subr.mxu0 0.0
        %1193 = vmatpush2.msra.mxu0 0.0
        %1194 = vmatprep.subr.mxu0 0.0
        %1195 = vmatpush2.msra.mxu0 0.0
        %1196 = vmatprep.subr.mxu0 0.0
        %1197 = vmatpush2.msra.mxu0 0.0
        %1198 = vmatprep.subr.mxu0 0.0
        %1199 = vmatpush2.msra.mxu0 0.0
        %1200 = vmatprep.subr.mxu0 0.0
        %1201 = vmatpush2.msra.mxu0 0.0
        %1202 = vmatprep.mubr.f32.mxu0 0.0
        %1203 = vmatmul.mubr.f32.gmra.mxu0 %v1133
        %v1204 = vpop.f32.mrf.mxu0
        %v1205 = vadd.f32 %v1137, %v1204
        %v1206 = vpop.f32.mrf.mxu0
        %1207 = vdwg.mxu0
        %v1208 = vadd.f32 %v1055, %v1205
        %v1209 = vsel %vm445, %v1208, 0.0
        %1210 = vadd.xlane.f32.xlu0 %v1209
        %v1211 = vpop.xlane.xlu0 %1210
        %v1212 = vmul.f32 %v1211, %v1035
        %v1213 = vsub.f32 %v1208, %v1212
        %v1214 = vmul.f32 %v1213, %v1213
        %v1215 = vsel %vm445, %v1214, 0.0
        %1216 = vadd.xlane.f32.xlu0 %v1215
        %v1217 = vpop.xlane.xlu0 %1216
        %v1218 = vmul.f32 %v1217, %v1035
        %v1219 = vadd.f32 %v1218, 1e-05
        %v1220 = vrsqrt.pop %v1219
        %v1221 = vmul.f32 %v1213, %v1220
        %v1222 = vlaneseq
        %v1223 = vshrl.u32 %v1222, 7
        %v1224 = vsub.s32 5, %v1223
        %v1225 = vrot.slane %v444, %v1224
        %v1226 = vmul.f32 %v1221, %v1225
        %v1227 = vlaneseq
        %v1228 = vshrl.u32 %v1227, 7
        %v1229 = vsub.s32 6, %v1228
        %v1230 = vrot.slane %v444, %v1229
        %v1231 = vadd.f32 %v1226, %v1230
        %1232 = vst.msk [vmem:[#allocation3] sm:$0xff] %vm445, %v1231
        %s1233 = sand.u32 %s225, 1
        %s1234 = scalar_lea.sflag [#allocation6], %s1233
        %s1235 = sand.u32 %s225, 1
        %s1236 = smul.addr %s1235, 16
        %s1237 = scalar_lea.vmem [#allocation5], %s1236
        // Predicated region
        $region61: #{tpu_custom_call.1} parent=47 // pred_check
          %p1238 = pneg %p209
        $region62: #{tpu_custom_call.1} parent=47 // pred_check_branch
          %1240 = sbr.rel (%p1238) target = $region64
        $region63: #{tpu_custom_call.1} parent=47 // pred_region
          %s1242 = ssub.s32 128, 128
          %1243 = vsyncadd [#allocation4], %s1242
          %s1245 = sshll.u32 [#allocation3], 4
          %s1246 = int_to_ptr.vmem [resolvable:$true] %s1245
          %1248 = dma.vmem_to_hbm [thread:$0]  %s1246, 128, %s7, [#allocation4]
        $region64: #{tpu_custom_call.1} parent=47 // pred_fallthru
          _
        // Predicated region
        $region65: #{tpu_custom_call.1} parent=47 // pred_check
          %p1249 = pneg %p235
        $region66: #{tpu_custom_call.1} parent=47 // pred_check_branch
          %1251 = sbr.rel (%p1249) target = $region68
        $region67: #{tpu_custom_call.1} parent=47 // pred_region
          %s1253 = ssub.s32 256, 256
          %1254 = vsyncadd %s1234, %s1253
          %s1255 = smul.addr %s24, 2
          %s1256 = smul.addr %s1255, 128
          %s1257 = scalar_lea.hbm %s8, %s1256
          %s1258 = sshll.u32 %s1237, 4
          %s1259 = int_to_ptr.vmem [resolvable:$true] %s1258
          %1264 = dma.vmem_to_hbm [thread:$0]  %s1259, 256, %s1257, %s1234, 128, 128, 8
        $region68: #{tpu_custom_call.1} parent=47 // pred_fallthru
          _
        // Predicated region
        $region69: #{tpu_custom_call.1} parent=47 // pred_check
          %p1265 = pneg %p209
        $region70: #{tpu_custom_call.1} parent=47 // pred_check_branch
          %1267 = sbr.rel (%p1265) target = $region72
        $region71: #{tpu_custom_call.1} parent=47 // pred_region
          %1268 = dma.done [#allocation4], 128
        $region72: #{tpu_custom_call.1} parent=47 // pred_fallthru
          _
      $region48: #{tpu_custom_call.1} parent=5 // pred_fallthru
        _
      %p1269 = scmp.le.s32.totalorder 2, %s19
      // Predicated region
      $region73: #{tpu_custom_call.1} parent=5 // pred_check
        %p1270 = pneg %p1269
      $region74: #{tpu_custom_call.1} parent=5 // pred_check_branch
        %1272 = sbr.rel (%p1270) target = $region76
      $region75: #{tpu_custom_call.1} parent=5 // pred_region
        %s1273 = ssub.s32 %s19, 2
        // Predicated region
        $region77: #{tpu_custom_call.1} parent=75 // pred_check
          %p1274 = pneg %p241
        $region78: #{tpu_custom_call.1} parent=75 // pred_check_branch
          %1276 = sbr.rel (%p1274) target = $region80
        $region79: #{tpu_custom_call.1} parent=75 // pred_region
          %s1277 = sand.u32 %s226, 1
          %s1278 = scalar_lea.sflag [#allocation6], %s1277
          %s1279 = sand.u32 %s226, 1
          %s1280 = smul.addr %s1279, 16
          %s1281 = scalar_lea.vmem [#allocation5], %s1280
          %1282 = dma.done %s1278, 256
        $region80: #{tpu_custom_call.1} parent=75 // pred_fallthru
          _
      $region76: #{tpu_custom_call.1} parent=5 // pred_fallthru
        _
    $region6: #{tpu_custom_call.1} parent=1 // loop_footer
      %s23 = sadd.s32 1, %s19
    $region7: #{tpu_custom_call.1} parent=1 // loop_footer_branch
      %18 = sbr.rel target = $region3
    $region8: #{tpu_custom_call.1} parent=1 // loop_exit
      _
    %1283 = vsyncpa [#allocation4], 1
    %s1284 = scalar_lea.sflag [#allocation4], 1
    %1285 = vsyncpa %s1284, 1
    %1286 = vsyncpa [#allocation6], 1
    %s1287 = scalar_lea.sflag [#allocation6], 1
    %1288 = vsyncpa %s1287, 1

</llo_original>
